<compile_context>
chip_gen: v7x
topology: tpu7x:2x2x1
jax: 0.10.0
libtpu: 0.0.40
codegen_flags: <defaults>
</compile_context>

<pallas_src>
import math

import jax
import jax.numpy as jnp
from jax.experimental import pallas as pl
from jax.experimental.pallas import tpu as pltpu


def _round_up(x, m):
    return ((x + m - 1) // m) * m


def _adsr_film_kernel(a_ref, c_ref, w1_ref, b1_ref, w2_ref, b2_ref, o_ref):
    # a_ref  : (1, 3*adsr_ch, T_TILE) bf16   -- stacked [A[t-1]; A[t]; A[t+1]] taps
    # c_ref  : (1, cont_ch,   T_TILE) C.dtype (f32 or bf16)
    # w1_ref : (hidden, 3*adsr_ch)    bf16   -- fused kernel-3 conv weight
    # b1_ref : (hidden, 1)            f32
    # w2_ref : (2*cont_ch, hidden)    bf16   -- fused k=1 conv weight (gamma stacked on beta)
    # b2_ref : (2*cont_ch, 1)         f32
    # o_ref  : (1, cont_ch, T_TILE)   C.dtype
    cont_ch = c_ref.shape[1]
    a_ct = a_ref[0]                                               # (3*adsr, T_TILE) bf16

    # Conv1d(adsr -> hidden, k=3, pad=1) == one MXU matmul over the stacked taps.
    h = jnp.dot(w1_ref[...], a_ct,
                preferred_element_type=jnp.float32) + b1_ref[...]  # (hidden, T_TILE) f32

    # Exact (erf-based) GELU -- matches torch.nn.GELU() default.
    h = 0.5 * h * (1.0 + jax.lax.erf(h * (1.0 / math.sqrt(2.0))))
    hb = h.astype(jnp.bfloat16)

    # Conv1d(hidden -> 2*cont, k=1): single fused MXU dot, then a free static split
    # (cont_ch = 256 is 8-sublane aligned).
    gb = jnp.dot(w2_ref[...], hb,
                 preferred_element_type=jnp.float32) + b2_ref[...]  # (2*cont, T_TILE) f32
    gamma = gb[:cont_ch]
    beta = gb[cont_ch:]

    # FiLM in native NCL layout; accumulate in f32, store in the output's (== C's) dtype.
    c = c_ref[0].astype(jnp.float32)
    o_ref[0] = (gamma * c + beta).astype(o_ref.dtype)


def adsr_film(A, C, params, *, t_tile=512):
    """A: (B, adsr_ch, T), C: (B, cont_ch, T)  ->  (B, cont_ch, T) in C.dtype (PyTorch NCL)."""
    w1, b1, w2, b2 = params      # torch shapes: (hid, adsr, 3), (hid,), (2c, hid, 1), (2c,)
    B, adsr_ch, T = A.shape
    cont_ch = C.shape[1]
    hidden = w1.shape[0]

    # ---- tile sizing: lane-dense T axis (multiple of 128); pad T instead of whole-T block ----
    t_tile = max(128, (t_tile // 128) * 128)
    t128 = _round_up(T, 128)
    if t128 <= t_tile:
        t_tile = t128
        t_pad_total = t128
    else:
        t_pad_total = _round_up(T, t_tile)
    num_t_tiles = t_pad_total // t_tile
    pad_t = t_pad_total - T

    # ---- small-tensor prep (the A path is tiny: 3*adsr_ch bf16 channels) ----
    a_bf = A.astype(jnp.bfloat16)
    if pad_t:
        a_bf = jnp.pad(a_bf, ((0, 0), (0, 0), (0, pad_t)))
    a_prev = jnp.pad(a_bf[:, :, :-1], ((0, 0), (0, 0), (1, 0)))   # A[:, :, t-1], zero @ t=0
    a_next = jnp.pad(a_bf[:, :, 1:], ((0, 0), (0, 0), (0, 1)))    # A[:, :, t+1], zero @ t=T-1
    a_taps = jnp.concatenate([a_prev, a_bf, a_next], axis=1)      # (B, 3*adsr, T_pad) bf16
    #   a_taps[b, k*adsr + i, t] = A[b, i, t + k - 1]   (zero-padded)

    c_in = C                                                      # native dtype, no upcast
    if pad_t:
        c_in = jnp.pad(c_in, ((0, 0), (0, 0), (0, pad_t)))

    # w1[o, i, k] -> w1_t[o, k*adsr + i]   (matches the tap stacking order above)
    w1_t = jnp.transpose(w1, (0, 2, 1)).reshape(hidden, 3 * adsr_ch).astype(jnp.bfloat16)
    b1_c = b1.reshape(hidden, 1).astype(jnp.float32)
    w2_m = w2[:, :, 0].astype(jnp.bfloat16)                       # (2*cont, hidden)
    b2_c = b2.reshape(2 * cont_ch, 1).astype(jnp.float32)

    out = pl.pallas_call(
        _adsr_film_kernel,
        out_shape=jax.ShapeDtypeStruct((B, cont_ch, t_pad_total), C.dtype),
        grid_spec=pltpu.PrefetchScalarGridSpec(
            num_scalar_prefetch=0,
            grid=(B, num_t_tiles),
            in_specs=[
                pl.BlockSpec((1, 3 * adsr_ch, t_tile), lambda b, t: (b, 0, t)),
                pl.BlockSpec((1, cont_ch, t_tile), lambda b, t: (b, 0, t)),
                pl.BlockSpec((hidden, 3 * adsr_ch), lambda b, t: (0, 0)),
                pl.BlockSpec((hidden, 1), lambda b, t: (0, 0)),
                pl.BlockSpec((2 * cont_ch, hidden), lambda b, t: (0, 0)),
                pl.BlockSpec((2 * cont_ch, 1), lambda b, t: (0, 0)),
            ],
            out_specs=pl.BlockSpec((1, cont_ch, t_tile), lambda b, t: (b, 0, t)),
        ),
        compiler_params=pltpu.CompilerParams(
            dimension_semantics=("parallel", "parallel")),
    )(a_taps, c_in, w1_t, b1_c, w2_m, b2_c)

    if pad_t:
        out = out[:, :, :T]
    return out                                                    # (B, cont_ch, T)


def adsr_film_reference(A, C, params):
    """Pure-JAX f32 reference mirroring the PyTorch forward (for validation)."""
    w1, b1, w2, b2 = params
    T = A.shape[2]
    cont_ch = C.shape[1]
    a_pad = jnp.pad(A, ((0, 0), (0, 0), (1, 1)))                          # padding=1
    taps = jnp.stack([a_pad[:, :, k:k + T] for k in range(3)], axis=-1)   # (B, adsr, T, 3)
    h = jnp.einsum("oik,bitk->bot", w1, taps) + b1[None, :, None]
    h = 0.5 * h * (1.0 + jax.lax.erf(h / jnp.sqrt(2.0)))                  # exact GELU
    gb = jnp.einsum("oi,bit->bot", w2[:, :, 0], h) + b2[None, :, None]
    gamma, beta = gb[:, :cont_ch], gb[:, cont_ch:]
    return gamma * C + beta


if __name__ == "__main__":
    B, T = 2, 200                                # T not a multiple of 128 -> exercises padding
    adsr_ch, cont_ch, hidden_ch = 64, 256, 128   # module defaults

    key = jax.random.PRNGKey(0)
    k_a, k_c, k_w1, k_b1, k_w2, k_b2 = jax.random.split(key, 6)

    A = jax.random.normal(k_a, (B, adsr_ch, T), dtype=jnp.float32)
    C = jax.random.normal(k_c, (B, cont_ch, T), dtype=jnp.float32)

    # Deterministic synthetic parameters (shapes per the module's __init__).
    # NOTE: the module zero-inits the last conv (output would be constant); small random
    # values are used instead so the kernel's hot path is actually exercised.
    w1 = 0.05 * jax.random.normal(k_w1, (hidden_ch, adsr_ch, 3), dtype=jnp.float32)
    b1 = 0.05 * jax.random.normal(k_b1, (hidden_ch,), dtype=jnp.float32)
    w2 = 0.05 * jax.random.normal(k_w2, (2 * cont_ch, hidden_ch, 1), dtype=jnp.float32)
    b2 = 0.05 * jax.random.normal(k_b2, (2 * cont_ch,), dtype=jnp.float32)
    params = (w1, b1, w2, b2)

    ref = adsr_film_reference(A, C, params)

    # Default (large) tile path: T padded to one 256-wide tile, f32 in -> f32 out.
    out = jax.block_until_ready(adsr_film(A, C, params))
    assert out.shape == (B, cont_ch, T), out.shape
    max_err = float(jnp.max(jnp.abs(out - ref)))
    mean_err = float(jnp.mean(jnp.abs(out - ref)))
    # bf16 MXU operands (f32 accumulate) vs. the f32 reference -> loosened tolerance.
    assert jnp.allclose(out, ref, rtol=5e-2, atol=5e-2), (max_err, mean_err)
    assert mean_err < 5e-3, (max_err, mean_err)

    # Multi-tile grid path (explicit small tile) must agree too.
    out_multi = jax.block_until_ready(adsr_film(A, C, params, t_tile=128))
    assert jnp.allclose(out_multi, ref, rtol=5e-2, atol=5e-2)

    # bf16 passthrough: output dtype follows C (halves dominant HBM traffic).
    out_bf = jax.block_until_ready(adsr_film(A, C.astype(jnp.bfloat16), params))
    assert out_bf.shape == (B, cont_ch, T) and out_bf.dtype == jnp.bfloat16

    print("KERNEL_OK")
</pallas_src>

<mosaic_0001>
module attributes {stable_mosaic.version = 11 : i64} {
  func.func @_adsr_film_kernel(%arg0: i32, %arg1: i32, %arg2: memref<1x192x256xbf16, #tpu.memory_space<vmem>>, %arg3: memref<1x256x256xf32, #tpu.memory_space<vmem>>, %arg4: memref<128x192xbf16, #tpu.memory_space<vmem>>, %arg5: memref<128x1xf32, #tpu.memory_space<vmem>>, %arg6: memref<512x128xbf16, #tpu.memory_space<vmem>>, %arg7: memref<512x1xf32, #tpu.memory_space<vmem>>, %arg8: memref<1x256x256xf32, #tpu.memory_space<vmem>>) attributes {dimension_semantics = [#tpu.dimension_semantics<parallel>, #tpu.dimension_semantics<parallel>], iteration_bounds = array<i64: 2, 1>, scalar_prefetch = 0 : i64, scratch_operands = 0 : i64, tpu.core_type = #tpu.core_type<tc>, window_params = [{transform_indices = @transform_0, window_bounds = array<i64: 1, 192, 256>}, {transform_indices = @transform_1, window_bounds = array<i64: 1, 256, 256>}, {pipeline_mode = #tpu.pipeline_mode<synchronous>, transform_indices = @transform_2, window_bounds = array<i64: 128, 192>}, {pipeline_mode = #tpu.pipeline_mode<synchronous>, transform_indices = @transform_3, window_bounds = array<i64: 128, 1>}, {pipeline_mode = #tpu.pipeline_mode<synchronous>, transform_indices = @transform_4, window_bounds = array<i64: 512, 128>}, {pipeline_mode = #tpu.pipeline_mode<synchronous>, transform_indices = @transform_5, window_bounds = array<i64: 512, 1>}, {transform_indices = @transform_6, window_bounds = array<i64: 1, 256, 256>}]} {
    %c0 = arith.constant 0 : index
    %c0_0 = arith.constant 0 : index
    %c0_1 = arith.constant 0 : index
    %0 = vector.load %arg2[%c0, %c0_0, %c0_1] : memref<1x192x256xbf16, #tpu.memory_space<vmem>>, vector<1x192x256xbf16>
    %1 = vector.shape_cast %0 : vector<1x192x256xbf16> to vector<192x256xbf16>
    %c0_2 = arith.constant 0 : index
    %c0_3 = arith.constant 0 : index
    %2 = vector.load %arg4[%c0_2, %c0_3] : memref<128x192xbf16, #tpu.memory_space<vmem>>, vector<128x192xbf16>
    %cst = arith.constant dense<0.000000e+00> : vector<128x256xf32>
    %3 = tpu.matmul %2, %1, %cst {dimension_numbers = #tpu.dot_dimension_numbers<[1], [0], [0], [1], [0, 0, 1, 1], [], []>} : vector<128x192xbf16>, vector<192x256xbf16>, vector<128x256xf32> -> vector<128x256xf32>
    %c0_4 = arith.constant 0 : index
    %c0_5 = arith.constant 0 : index
    %4 = vector.load %arg5[%c0_4, %c0_5] : memref<128x1xf32, #tpu.memory_space<vmem>>, vector<128x1xf32>
    %5 = vector.broadcast %4 : vector<128x1xf32> to vector<128x256xf32>
    %6 = arith.addf %3, %5 : vector<128x256xf32>
    %cst_6 = arith.constant 5.000000e-01 : f32
    %7 = vector.broadcast %cst_6 : f32 to vector<128x256xf32>
    %8 = arith.mulf %7, %6 : vector<128x256xf32>
    %cst_7 = arith.constant 0.707106769 : f32
    %9 = vector.broadcast %cst_7 : f32 to vector<128x256xf32>
    %10 = arith.mulf %6, %9 : vector<128x256xf32>
    %11 = math.erf %10 : vector<128x256xf32>
    %cst_8 = arith.constant 1.000000e+00 : f32
    %12 = vector.broadcast %cst_8 : f32 to vector<128x256xf32>
    %13 = arith.addf %12, %11 : vector<128x256xf32>
    %14 = arith.mulf %8, %13 : vector<128x256xf32>
    %15 = arith.truncf %14 : vector<128x256xf32> to vector<128x256xbf16>
    %c0_9 = arith.constant 0 : index
    %c0_10 = arith.constant 0 : index
    %16 = vector.load %arg6[%c0_9, %c0_10] : memref<512x128xbf16, #tpu.memory_space<vmem>>, vector<512x128xbf16>
    %cst_11 = arith.constant dense<0.000000e+00> : vector<512x256xf32>
    %17 = tpu.matmul %16, %15, %cst_11 {dimension_numbers = #tpu.dot_dimension_numbers<[1], [0], [0], [1], [0, 0, 1, 1], [], []>} : vector<512x128xbf16>, vector<128x256xbf16>, vector<512x256xf32> -> vector<512x256xf32>
    %c0_12 = arith.constant 0 : index
    %c0_13 = arith.constant 0 : index
    %18 = vector.load %arg7[%c0_12, %c0_13] : memref<512x1xf32, #tpu.memory_space<vmem>>, vector<512x1xf32>
    %19 = vector.broadcast %18 : vector<512x1xf32> to vector<512x256xf32>
    %20 = arith.addf %17, %19 : vector<512x256xf32>
    %21 = vector.extract_strided_slice %20 {offsets = [0, 0], sizes = [256, 256], strides = [1, 1]} : vector<512x256xf32> to vector<256x256xf32>
    %22 = vector.extract_strided_slice %20 {offsets = [256, 0], sizes = [256, 256], strides = [1, 1]} : vector<512x256xf32> to vector<256x256xf32>
    %c0_14 = arith.constant 0 : index
    %c0_15 = arith.constant 0 : index
    %c0_16 = arith.constant 0 : index
    %23 = vector.load %arg3[%c0_14, %c0_15, %c0_16] : memref<1x256x256xf32, #tpu.memory_space<vmem>>, vector<1x256x256xf32>
    %24 = vector.shape_cast %23 : vector<1x256x256xf32> to vector<256x256xf32>
    %25 = arith.mulf %21, %24 : vector<256x256xf32>
    %26 = arith.addf %25, %22 : vector<256x256xf32>
    %c0_17 = arith.constant 0 : index
    %c0_18 = arith.constant 0 : index
    %c0_19 = arith.constant 0 : index
    %27 = vector.load %arg8[%c0_17, %c0_18, %c0_19] : memref<1x256x256xf32, #tpu.memory_space<vmem>>, vector<1x256x256xf32>
    %28 = vector.shape_cast %27 : vector<1x256x256xf32> to vector<256x256xf32>
    %29 = vector.shape_cast %26 : vector<256x256xf32> to vector<1x256x256xf32>
    tpu.vector_store %arg8[%c0_17, %c0_18, %c0_19], %29 {strides = array<i32>} : memref<1x256x256xf32, #tpu.memory_space<vmem>>, vector<1x256x256xf32>,
    return
  }
  func.func @transform_0(%arg0: i32, %arg1: i32) -> (i32, i32, i32) {
    %c0_i32 = arith.constant 0 : i32
    %c0_i32_0 = arith.constant 0 : i32
    return %arg0, %c0_i32, %arg1 : i32, i32, i32
  }
  func.func @transform_1(%arg0: i32, %arg1: i32) -> (i32, i32, i32) {
    %c0_i32 = arith.constant 0 : i32
    %c0_i32_0 = arith.constant 0 : i32
    return %arg0, %c0_i32, %arg1 : i32, i32, i32
  }
  func.func @transform_2(%arg0: i32, %arg1: i32) -> (i32, i32) {
    %c0_i32 = arith.constant 0 : i32
    %c0_i32_0 = arith.constant 0 : i32
    %c0_i32_1 = arith.constant 0 : i32
    return %c0_i32, %c0_i32_0 : i32, i32
  }
  func.func @transform_3(%arg0: i32, %arg1: i32) -> (i32, i32) {
    %c0_i32 = arith.constant 0 : i32
    %c0_i32_0 = arith.constant 0 : i32
    %c0_i32_1 = arith.constant 0 : i32
    return %c0_i32, %c0_i32_0 : i32, i32
  }
  func.func @transform_4(%arg0: i32, %arg1: i32) -> (i32, i32) {
    %c0_i32 = arith.constant 0 : i32
    %c0_i32_0 = arith.constant 0 : i32
    %c0_i32_1 = arith.constant 0 : i32
    return %c0_i32, %c0_i32_0 : i32, i32
  }
  func.func @transform_5(%arg0: i32, %arg1: i32) -> (i32, i32) {
    %c0_i32 = arith.constant 0 : i32
    %c0_i32_0 = arith.constant 0 : i32
    %c0_i32_1 = arith.constant 0 : i32
    return %c0_i32, %c0_i32_0 : i32, i32
  }
  func.func @transform_6(%arg0: i32, %arg1: i32) -> (i32, i32, i32) {
    %c0_i32 = arith.constant 0 : i32
    %c0_i32_0 = arith.constant 0 : i32
    return %arg0, %c0_i32, %arg1 : i32, i32, i32
  }
}

</mosaic_0001>

<llo_original>
// kernel: tpu_custom_call.1
$region0: #{tpu_custom_call.1}
  #allocation0 [shape = 'u32[]', space=smem, size = 0x4, offset = 0x4, fixed_abs, tag = 'smem constant byte address 0x4 - core index']
  #allocation1 [shape = 'u32[144,128]{1,0:T(1,128)}', space=vmem, size = 0x12000, scoped, tag = 'internal scratch']
  %s0 = inlined_call_operand.vmem [shape: bf16[2,192,256], index: 0, kind: input, shape index: {}]
  %s1 = inlined_call_operand.hbm [shape: f32[2,256,256], index: 1, kind: input, shape index: {}]
  %s2 = inlined_call_operand.vmem [shape: bf16[128,192], index: 2, kind: input, shape index: {}]
  %s3 = inlined_call_operand.vmem [shape: f32[128,1], index: 3, kind: input, shape index: {}]
  %s4 = inlined_call_operand.vmem [shape: bf16[512,128], index: 4, kind: input, shape index: {}]
  %s5 = inlined_call_operand.vmem [shape: f32[512,1], index: 5, kind: input, shape index: {}]
  %s6 = inlined_call_operand.hbm [shape: f32[2,256,256], index: 6, kind: output, shape index: {}]
  %s7 = sld [smem:[#allocation0]]
  $region61: #{tpu_custom_call.1} parent=0
    _
  %s9 = ssub.s32 1, %s7
  %s10 = scalar_select 0, %s9, %s7
  $region1: #{tpu_custom_call.1} parent=0
    #allocation2 [shape = 'u8[524288]{0}', space=vmem, size = 0x80000, scoped, tag = 'input window, operand 1']
    #allocation3 [shape = 's32[2]{0}', space=sflag, size = 0x8, scoped, tag = 'scoped memory for tpu_custom_call.1']
    #allocation4 [shape = 's32[2]{0}', space=sflag, size = 0x8, scoped, tag = 'scoped memory for tpu_custom_call.1']
    #allocation5 [shape = 'u8[524288]{0}', space=vmem, size = 0x80000, scoped, tag = 'output window, operand 0']
    %11 = vsyncpa [#allocation3], 0
    %s12 = scalar_lea.sflag [#allocation3], 1
    %13 = vsyncpa %s12, 0
    %14 = vsyncpa [#allocation4], 0
    %s15 = scalar_lea.sflag [#allocation4], 1
    %16 = vsyncpa %s15, 0
    loop: start=0, step=1, limit=4
    $region2: #{tpu_custom_call.1} parent=1 // loop_pre_header
      _
    $region3: #{tpu_custom_call.1} parent=1 // loop_header
      %s18 = sphi 0, %s22
      %p19 = scmp.ge.s32.totalorder %s18, 4
      %s25 = sphi 0, %s37
      %s26 = sphi 0, %s33
      %s27 = sphi 0, %s25
      %s28 = sphi 0, %s26
      %s29 = sphi 0, %s27
      %s30 = sphi 0, %s28
      %s42 = sphi 0, %s44
      %s45 = sphi 0, %s42
      %s46 = sphi 0, %s45
      %s62 = sphi 0, %s46
      %s70 = sphi 0, %s72
      %s73 = sphi 0, %s70
      %s74 = sphi 0, %s73
      %s90 = sphi 0, %s74
      %s94 = sphi 0, %s94
      %s96 = sphi 0, %s94
      %s97 = sphi 0, %s96
      %s111 = sphi 0, %s97
      %s115 = sphi 0, %s115
      %s117 = sphi 0, %s115
      %s118 = sphi 0, %s117
      %s132 = sphi 0, %s118
      %s136 = sphi 0, %s136
      %s138 = sphi 0, %s136
      %s139 = sphi 0, %s138
      %s153 = sphi 0, %s139
      %s157 = sphi 0, %s157
      %s159 = sphi 0, %s157
      %s160 = sphi 0, %s159
      %s174 = sphi 0, %s160
      %s182 = sphi 0, %s184
      %s185 = sphi 0, %s182
      %s186 = sphi 0, %s185
      %s202 = sphi 0, %s186
    $region4: #{tpu_custom_call.1} parent=1 // loop_header_branch
      %21 = sbr.rel (%p19) target = $region8
    $region5: #{tpu_custom_call.1} parent=1 // loop_body
      %s23 = ssub.s32 %s18, 1
      %s24 = ssub.s32 %s18, 2
      %s31 = sadd.s32 1, %s26
      %p32 = scmp.ge.s32.totalorder %s31, 1
      %s33 = scalar_select %p32, 0, %s31
      %s34 = sadd.s32 1, %s25
      %s35 = scalar_select %p32, %s34, %s25
      %p36 = scmp.ge.s32.totalorder %s35, 2
      %s37 = scalar_select %p36, 0, %s35
      %s38 = ssub.s32 %s25, %s37
      %s39 = ssub.s32 %s26, %s33
      %s40 = sor.u32 %s38, %s39
      %p41 = scmp.eq.s32.totalorder %s40, 0
      %s43 = sadd.s32 %s42, 1
      %s44 = scalar_select %p41, %s42, %s43
      %p47 = pneg %p41
      %p48 = scmp.eq.s32.totalorder %s18, 1
      %p49 = por %p47, %p48
      %p50 = scmp.ne.s32.totalorder %s42, %s45
      %p51 = scmp.eq.s32.totalorder %s18, 0
      %p52 = por %p50, %p51
      %p53 = scmp.ne.s32.totalorder %s42, %s45
      %p54 = scmp.eq.s32.totalorder %s23, 1
      %p55 = por %p53, %p54
      %p56 = scmp.ne.s32.totalorder %s45, %s46
      %p57 = scmp.eq.s32.totalorder %s23, 0
      %p58 = por %p56, %p57
      %p59 = scmp.ne.s32.totalorder %s45, %s46
      %p60 = scmp.eq.s32.totalorder %s24, 1
      %p61 = por %p59, %p60
      %p63 = scmp.ne.s32.totalorder %s46, %s62
      %p64 = scmp.eq.s32.totalorder %s24, 0
      %p65 = por %p63, %p64
      %s66 = ssub.s32 %s25, %s37
      %s67 = ssub.s32 %s26, %s33
      %s68 = sor.u32 %s66, %s67
      %p69 = scmp.eq.s32.totalorder %s68, 0
      %s71 = sadd.s32 %s70, 1
      %s72 = scalar_select %p69, %s70, %s71
      %p75 = pneg %p69
      %p76 = scmp.eq.s32.totalorder %s18, 1
      %p77 = por %p75, %p76
      %p78 = scmp.ne.s32.totalorder %s70, %s73
      %p79 = scmp.eq.s32.totalorder %s18, 0
      %p80 = por %p78, %p79
      %p81 = scmp.ne.s32.totalorder %s70, %s73
      %p82 = scmp.eq.s32.totalorder %s23, 1
      %p83 = por %p81, %p82
      %p84 = scmp.ne.s32.totalorder %s73, %s74
      %p85 = scmp.eq.s32.totalorder %s23, 0
      %p86 = por %p84, %p85
      %p87 = scmp.ne.s32.totalorder %s73, %s74
      %p88 = scmp.eq.s32.totalorder %s24, 1
      %p89 = por %p87, %p88
      %p91 = scmp.ne.s32.totalorder %s74, %s90
      %p92 = scmp.eq.s32.totalorder %s24, 0
      %p93 = por %p91, %p92
      %s95 = sadd.s32 %s94, 1
      %p98 = scmp.eq.s32.totalorder %s18, 1
      %p99 = scmp.ne.s32.totalorder %s94, %s96
      %p100 = scmp.eq.s32.totalorder %s18, 0
      %p101 = por %p99, %p100
      %p102 = scmp.ne.s32.totalorder %s94, %s96
      %p103 = scmp.eq.s32.totalorder %s23, 1
      %p104 = por %p102, %p103
      %p105 = scmp.ne.s32.totalorder %s96, %s97
      %p106 = scmp.eq.s32.totalorder %s23, 0
      %p107 = por %p105, %p106
      %p108 = scmp.ne.s32.totalorder %s96, %s97
      %p109 = scmp.eq.s32.totalorder %s24, 1
      %p110 = por %p108, %p109
      %p112 = scmp.ne.s32.totalorder %s97, %s111
      %p113 = scmp.eq.s32.totalorder %s24, 0
      %p114 = por %p112, %p113
      %s116 = sadd.s32 %s115, 1
      %p119 = scmp.eq.s32.totalorder %s18, 1
      %p120 = scmp.ne.s32.totalorder %s115, %s117
      %p121 = scmp.eq.s32.totalorder %s18, 0
      %p122 = por %p120, %p121
      %p123 = scmp.ne.s32.totalorder %s115, %s117
      %p124 = scmp.eq.s32.totalorder %s23, 1
      %p125 = por %p123, %p124
      %p126 = scmp.ne.s32.totalorder %s117, %s118
      %p127 = scmp.eq.s32.totalorder %s23, 0
      %p128 = por %p126, %p127
      %p129 = scmp.ne.s32.totalorder %s117, %s118
      %p130 = scmp.eq.s32.totalorder %s24, 1
      %p131 = por %p129, %p130
      %p133 = scmp.ne.s32.totalorder %s118, %s132
      %p134 = scmp.eq.s32.totalorder %s24, 0
      %p135 = por %p133, %p134
      %s137 = sadd.s32 %s136, 1
      %p140 = scmp.eq.s32.totalorder %s18, 1
      %p141 = scmp.ne.s32.totalorder %s136, %s138
      %p142 = scmp.eq.s32.totalorder %s18, 0
      %p143 = por %p141, %p142
      %p144 = scmp.ne.s32.totalorder %s136, %s138
      %p145 = scmp.eq.s32.totalorder %s23, 1
      %p146 = por %p144, %p145
      %p147 = scmp.ne.s32.totalorder %s138, %s139
      %p148 = scmp.eq.s32.totalorder %s23, 0
      %p149 = por %p147, %p148
      %p150 = scmp.ne.s32.totalorder %s138, %s139
      %p151 = scmp.eq.s32.totalorder %s24, 1
      %p152 = por %p150, %p151
      %p154 = scmp.ne.s32.totalorder %s139, %s153
      %p155 = scmp.eq.s32.totalorder %s24, 0
      %p156 = por %p154, %p155
      %s158 = sadd.s32 %s157, 1
      %p161 = scmp.eq.s32.totalorder %s18, 1
      %p162 = scmp.ne.s32.totalorder %s157, %s159
      %p163 = scmp.eq.s32.totalorder %s18, 0
      %p164 = por %p162, %p163
      %p165 = scmp.ne.s32.totalorder %s157, %s159
      %p166 = scmp.eq.s32.totalorder %s23, 1
      %p167 = por %p165, %p166
      %p168 = scmp.ne.s32.totalorder %s159, %s160
      %p169 = scmp.eq.s32.totalorder %s23, 0
      %p170 = por %p168, %p169
      %p171 = scmp.ne.s32.totalorder %s159, %s160
      %p172 = scmp.eq.s32.totalorder %s24, 1
      %p173 = por %p171, %p172
      %p175 = scmp.ne.s32.totalorder %s160, %s174
      %p176 = scmp.eq.s32.totalorder %s24, 0
      %p177 = por %p175, %p176
      %s178 = ssub.s32 %s25, %s37
      %s179 = ssub.s32 %s26, %s33
      %s180 = sor.u32 %s178, %s179
      %p181 = scmp.eq.s32.totalorder %s180, 0
      %s183 = sadd.s32 %s182, 1
      %s184 = scalar_select %p181, %s182, %s183
      %p187 = pneg %p181
      %p188 = scmp.eq.s32.totalorder %s18, 1
      %p189 = por %p187, %p188
      %p190 = scmp.ne.s32.totalorder %s182, %s185
      %p191 = scmp.eq.s32.totalorder %s18, 0
      %p192 = por %p190, %p191
      %p193 = scmp.ne.s32.totalorder %s182, %s185
      %p194 = scmp.eq.s32.totalorder %s23, 1
      %p195 = por %p193, %p194
      %p196 = scmp.ne.s32.totalorder %s185, %s186
      %p197 = scmp.eq.s32.totalorder %s23, 0
      %p198 = por %p196, %p197
      %p199 = scmp.ne.s32.totalorder %s185, %s186
      %p200 = scmp.eq.s32.totalorder %s24, 1
      %p201 = por %p199, %p200
      %p203 = scmp.ne.s32.totalorder %s186, %s202
      %p204 = scmp.eq.s32.totalorder %s24, 0
      %p205 = por %p203, %p204
      %p206 = scmp.le.s32.totalorder 1, %s18
      %p207 = scmp.lt.s32.totalorder %s18, 3
      %p208 = pnand %p206, %p207
      %p209 = pneg %p208
      // Predicated region
      $region9: #{tpu_custom_call.1} parent=5 // pred_check
        _
      $region10: #{tpu_custom_call.1} parent=5 // pred_check_branch
        %211 = sbr.rel (%p208) target = $region12
      $region11: #{tpu_custom_call.1} parent=5 // pred_region
        %s212 = ssub.s32 %s18, 1
        // Predicated region
        $region13: #{tpu_custom_call.1} parent=11 // pred_check
          %p213 = pneg %p107
        $region14: #{tpu_custom_call.1} parent=11 // pred_check_branch
          %215 = sbr.rel (%p213) target = $region16
        $region15: #{tpu_custom_call.1} parent=11 // pred_region
          _
        $region16: #{tpu_custom_call.1} parent=11 // pred_fallthru
          _
        // Predicated region
        $region17: #{tpu_custom_call.1} parent=11 // pred_check
          %p216 = pneg %p128
        $region18: #{tpu_custom_call.1} parent=11 // pred_check_branch
          %218 = sbr.rel (%p216) target = $region20
        $region19: #{tpu_custom_call.1} parent=11 // pred_region
          _
        $region20: #{tpu_custom_call.1} parent=11 // pred_fallthru
          _
        // Predicated region
        $region21: #{tpu_custom_call.1} parent=11 // pred_check
          %p219 = pneg %p149
        $region22: #{tpu_custom_call.1} parent=11 // pred_check_branch
          %221 = sbr.rel (%p219) target = $region24
        $region23: #{tpu_custom_call.1} parent=11 // pred_region
          _
        $region24: #{tpu_custom_call.1} parent=11 // pred_fallthru
          _
        // Predicated region
        $region25: #{tpu_custom_call.1} parent=11 // pred_check
          %p222 = pneg %p170
        $region26: #{tpu_custom_call.1} parent=11 // pred_check_branch
          %224 = sbr.rel (%p222) target = $region28
        $region27: #{tpu_custom_call.1} parent=11 // pred_region
          _
        $region28: #{tpu_custom_call.1} parent=11 // pred_fallthru
          _
      $region12: #{tpu_custom_call.1} parent=5 // pred_fallthru
        _
      %p225 = scmp.lt.s32.totalorder %s18, 2
      // Predicated region
      $region29: #{tpu_custom_call.1} parent=5 // pred_check
        %p226 = pneg %p225
      $region30: #{tpu_custom_call.1} parent=5 // pred_check_branch
        %228 = sbr.rel (%p226) target = $region32
      $region31: #{tpu_custom_call.1} parent=5 // pred_region
        // Predicated region
        $region33: #{tpu_custom_call.1} parent=31 // pred_check
          %p229 = pneg %p52
        $region34: #{tpu_custom_call.1} parent=31 // pred_check_branch
          %231 = sbr.rel (%p229) target = $region36
        $region35: #{tpu_custom_call.1} parent=31 // pred_region
          %s232 = smul.u32 2, %s26
          %p233 = scmp.lt.s32.totalorder %s25, 1
          %s234 = scalar_select %p233, %s25, 1
          %p235 = scmp.lt.s32.totalorder %s232, 1
          %s236 = scalar_select %p235, %s232, 1
          %s237 = smul.addr %s234, 48
          %s238 = sadd.s32 %s236, %s237
          %s239 = smul.addr %s238, 4
          %s240 = scalar_lea.vmem %s0, %s239
          %s241 = smul.u32 2, %s26
        $region36: #{tpu_custom_call.1} parent=31 // pred_fallthru
          _
        // Predicated region
        $region37: #{tpu_custom_call.1} parent=31 // pred_check
          %p242 = pneg %p80
        $region38: #{tpu_custom_call.1} parent=31 // pred_check_branch
          %244 = sbr.rel (%p242) target = $region40
        $region39: #{tpu_custom_call.1} parent=31 // pred_region
          %s245 = sand.u32 %s70, 1
          %s246 = scalar_lea.sflag [#allocation3], %s245
          %s247 = sand.u32 %s70, 1
          %s248 = smul.addr %s247, 512
          %s249 = scalar_lea.vmem [#allocation2], %s248
          %s250 = smul.u32 2, %s26
          %s252 = ssub.s32 8192, 8192
          %253 = vsyncadd %s246, %s252
          %s254 = smul.addr %s25, 64
          %s255 = sadd.s32 %s250, %s254
          %s256 = smul.addr %s255, 128
          %s257 = scalar_lea.hbm %s1, %s256
          %s258 = sshll.u32 %s249, 4
          %s259 = int_to_ptr.vmem [resolvable:$true] %s258
          %264 = dma.hbm_to_vmem [thread:$0]  %s257, 8192, %s259, %s246, 256, 256, 16
        $region40: #{tpu_custom_call.1} parent=31 // pred_fallthru
          _
      $region32: #{tpu_custom_call.1} parent=5 // pred_fallthru
        _
      %p265 = scmp.le.s32.totalorder 1, %s18
      %p266 = scmp.lt.s32.totalorder %s18, 3
      %p267 = pnand %p265, %p266
      %p268 = pneg %p267
      // Predicated region
      $region41: #{tpu_custom_call.1} parent=5 // pred_check
        _
      $region42: #{tpu_custom_call.1} parent=5 // pred_check_branch
        %270 = sbr.rel (%p267) target = $region44
      $region43: #{tpu_custom_call.1} parent=5 // pred_region
        %s271 = ssub.s32 %s18, 1
        %s272 = sand.u32 %s73, 1
        %s273 = scalar_lea.sflag [#allocation3], %s272
        %s274 = sand.u32 %s73, 1
        %s275 = smul.addr %s274, 512
        %s276 = scalar_lea.vmem [#allocation2], %s275
        // Predicated region
        $region45: #{tpu_custom_call.1} parent=43 // pred_check
          %p277 = pneg %p86
        $region46: #{tpu_custom_call.1} parent=43 // pred_check_branch
          %279 = sbr.rel (%p277) target = $region48
        $region47: #{tpu_custom_call.1} parent=43 // pred_region
          %280 = dma.done %s273, 8192
        $region48: #{tpu_custom_call.1} parent=43 // pred_fallthru
          _
        %s281 = smul.u32 2, %s28
        %p282 = scmp.lt.s32.totalorder %s27, 1
        %s283 = scalar_select %p282, %s27, 1
        %p284 = scmp.lt.s32.totalorder %s281, 1
        %s285 = scalar_select %p284, %s281, 1
        %s286 = smul.addr %s283, 48
        %s287 = sadd.s32 %s285, %s286
        %s288 = smul.addr %s287, 4
        %s289 = scalar_lea.vmem %s0, %s288
        %p290 = pneg %p58
        %p291 = pneg %p55
        %s292 = sand.u32 %s73, 1
        %s293 = scalar_lea.sflag [#allocation3], %s292
        %s294 = sand.u32 %s73, 1
        %s295 = smul.addr %s294, 512
        %s296 = scalar_lea.vmem [#allocation2], %s295
        %p297 = pneg %p86
        %p298 = pneg %p83
        %p299 = pneg %p107
        %p300 = pneg %p104
        %p301 = pneg %p128
        %p302 = pneg %p125
        %p303 = pneg %p149
        %p304 = pneg %p146
        %p305 = pneg %p170
        %p306 = pneg %p167
        %p307 = pneg %p198
        %p308 = pneg %p195
        %s309 = sand.u32 %s185, 1
        %s310 = scalar_lea.sflag [#allocation4], %s309
        %s311 = sand.u32 %s185, 1
        %s312 = smul.addr %s311, 512
        %s313 = scalar_lea.vmem [#allocation5], %s312
        %s314 = smul.u32 2, %s28
        %p315 = scmp.lt.s32.totalorder %s27, 1
        %s316 = scalar_select %p315, %s27, 1
        %p317 = scmp.lt.s32.totalorder %s314, 1
        %s318 = scalar_select %p317, %s314, 1
        %s319 = smul.addr %s316, 48
        %s320 = sadd.s32 %s318, %s319
        %s321 = smul.addr %s320, 4
        %s322 = scalar_lea.vmem %s0, %s321
        %s323 = smul.u32 2, %s28
        %s324 = smul.u32 2, %s28
        %s325 = smul.u32 2, %s28
        %v327 = vld [vmem:[%s322] sm:$0xff]
        %v328 = vld [vmem:[%s322 + $0x8] sm:$0xff]
        %v329 = vld [vmem:[%s322 + $0x10] sm:$0xff]
        %v330 = vld [vmem:[%s322 + $0x18] sm:$0xff]
        %v331 = vld [vmem:[%s322 + $0x20] sm:$0xff]
        %v332 = vld [vmem:[%s322 + $0x28] sm:$0xff]
        %v333 = vld [vmem:[%s322 + $0x30] sm:$0xff]
        %v334 = vld [vmem:[%s322 + $0x38] sm:$0xff]
        %v335 = vld [vmem:[%s322 + $0x40] sm:$0xff]
        %v336 = vld [vmem:[%s322 + $0x48] sm:$0xff]
        %v337 = vld [vmem:[%s322 + $0x50] sm:$0xff]
        %v338 = vld [vmem:[%s322 + $0x58] sm:$0xff]
        %v339 = vld [vmem:[%s322 + $0x60] sm:$0xff]
        %v340 = vld [vmem:[%s322 + $0x68] sm:$0xff]
        %v341 = vld [vmem:[%s322 + $0x70] sm:$0xff]
        %v342 = vld [vmem:[%s322 + $0x78] sm:$0xff]
        %v343 = vld [vmem:[%s322 + $0x80] sm:$0xff]
        %v344 = vld [vmem:[%s322 + $0x88] sm:$0xff]
        %v345 = vld [vmem:[%s322 + $0x90] sm:$0xff]
        %v346 = vld [vmem:[%s322 + $0x98] sm:$0xff]
        %v347 = vld [vmem:[%s322 + $0xa0] sm:$0xff]
        %v348 = vld [vmem:[%s322 + $0xa8] sm:$0xff]
        %v349 = vld [vmem:[%s322 + $0xb0] sm:$0xff]
        %v350 = vld [vmem:[%s322 + $0xb8] sm:$0xff]
        %v351 = vld [vmem:[%s2] sm:$0xff]
        %v352 = vld [vmem:[%s2 + $0x8] sm:$0xff]
        %v353 = vld [vmem:[%s2 + $0x10] sm:$0xff]
        %v354 = vld [vmem:[%s2 + $0x18] sm:$0xff]
        %v355 = vld [vmem:[%s2 + $0x20] sm:$0xff]
        %v356 = vld [vmem:[%s2 + $0x28] sm:$0xff]
        %v357 = vld [vmem:[%s2 + $0x30] sm:$0xff]
        %v358 = vld [vmem:[%s2 + $0x38] sm:$0xff]
        %v359 = vld [vmem:[%s2 + $0x40] sm:$0xff]
        %v360 = vld [vmem:[%s2 + $0x48] sm:$0xff]
        %v361 = vld [vmem:[%s2 + $0x50] sm:$0xff]
        %v362 = vld [vmem:[%s2 + $0x58] sm:$0xff]
        %v363 = vld [vmem:[%s2 + $0x60] sm:$0xff]
        %v364 = vld [vmem:[%s2 + $0x68] sm:$0xff]
        %v365 = vld [vmem:[%s2 + $0x70] sm:$0xff]
        %v366 = vld [vmem:[%s2 + $0x78] sm:$0xff]
        %v367 = vld [vmem:[%s3] sm:$0xff]
        %v368 = vld [vmem:[%s3 + $0x8] sm:$0xff]
        %v369 = vld [vmem:[%s3 + $0x10] sm:$0xff]
        %v370 = vld [vmem:[%s3 + $0x18] sm:$0xff]
        %v371 = vld [vmem:[%s3 + $0x20] sm:$0xff]
        %v372 = vld [vmem:[%s3 + $0x28] sm:$0xff]
        %v373 = vld [vmem:[%s3 + $0x30] sm:$0xff]
        %v374 = vld [vmem:[%s3 + $0x38] sm:$0xff]
        %v375 = vld [vmem:[%s3 + $0x40] sm:$0xff]
        %v376 = vld [vmem:[%s3 + $0x48] sm:$0xff]
        %v377 = vld [vmem:[%s3 + $0x50] sm:$0xff]
        %v378 = vld [vmem:[%s3 + $0x58] sm:$0xff]
        %v379 = vld [vmem:[%s3 + $0x60] sm:$0xff]
        %v380 = vld [vmem:[%s3 + $0x68] sm:$0xff]
        %v381 = vld [vmem:[%s3 + $0x70] sm:$0xff]
        %v382 = vld [vmem:[%s3 + $0x78] sm:$0xff]
        %384 = vset.pattern.permute.xlu0 0
        %385 = vperm.xlu0 %384, %v367
        %v386 = vpop.permute.xlu0 %385
        %389 = vset.pattern.permute.xlu0 0
        %390 = vperm.xlu0 %389, %v368
        %v391 = vpop.permute.xlu0 %390
        %394 = vset.pattern.permute.xlu0 0
        %395 = vperm.xlu0 %394, %v369
        %v396 = vpop.permute.xlu0 %395
        %399 = vset.pattern.permute.xlu0 0
        %400 = vperm.xlu0 %399, %v370
        %v401 = vpop.permute.xlu0 %400
        %404 = vset.pattern.permute.xlu0 0
        %405 = vperm.xlu0 %404, %v371
        %v406 = vpop.permute.xlu0 %405
        %409 = vset.pattern.permute.xlu0 0
        %410 = vperm.xlu0 %409, %v372
        %v411 = vpop.permute.xlu0 %410
        %414 = vset.pattern.permute.xlu0 0
        %415 = vperm.xlu0 %414, %v373
        %v416 = vpop.permute.xlu0 %415
        %419 = vset.pattern.permute.xlu0 0
        %420 = vperm.xlu0 %419, %v374
        %v421 = vpop.permute.xlu0 %420
        %424 = vset.pattern.permute.xlu0 0
        %425 = vperm.xlu0 %424, %v375
        %v426 = vpop.permute.xlu0 %425
        %429 = vset.pattern.permute.xlu0 0
        %430 = vperm.xlu0 %429, %v376
        %v431 = vpop.permute.xlu0 %430
        %434 = vset.pattern.permute.xlu0 0
        %435 = vperm.xlu0 %434, %v377
        %v436 = vpop.permute.xlu0 %435
        %439 = vset.pattern.permute.xlu0 0
        %440 = vperm.xlu0 %439, %v378
        %v441 = vpop.permute.xlu0 %440
        %444 = vset.pattern.permute.xlu0 0
        %445 = vperm.xlu0 %444, %v379
        %v446 = vpop.permute.xlu0 %445
        %449 = vset.pattern.permute.xlu0 0
        %450 = vperm.xlu0 %449, %v380
        %v451 = vpop.permute.xlu0 %450
        %454 = vset.pattern.permute.xlu0 0
        %455 = vperm.xlu0 %454, %v381
        %v456 = vpop.permute.xlu0 %455
        %459 = vset.pattern.permute.xlu0 0
        %460 = vperm.xlu0 %459, %v382
        %v461 = vpop.permute.xlu0 %460
        %v479 = vunpack.c.l.b16 %v351
        %v480 = vunpack.c.h.b16 %v351
        %v481 = vunpack.c.l.b16 %v352
        %v482 = vunpack.c.h.b16 %v352
        %v483 = vunpack.c.l.b16 %v353
        %v484 = vunpack.c.h.b16 %v353
        %v485 = vunpack.c.l.b16 %v354
        %v486 = vunpack.c.h.b16 %v354
        %v487 = vunpack.c.l.b16 %v355
        %v488 = vunpack.c.h.b16 %v355
        %v489 = vunpack.c.l.b16 %v356
        %v490 = vunpack.c.h.b16 %v356
        %v491 = vunpack.c.l.b16 %v357
        %v492 = vunpack.c.h.b16 %v357
        %v493 = vunpack.c.l.b16 %v358
        %v494 = vunpack.c.h.b16 %v358
        %v495 = vunpack.c.l.b16 %v359
        %v496 = vunpack.c.h.b16 %v359
        %v497 = vunpack.c.l.b16 %v360
        %v498 = vunpack.c.h.b16 %v360
        %v499 = vunpack.c.l.b16 %v361
        %v500 = vunpack.c.h.b16 %v361
        %v501 = vunpack.c.l.b16 %v362
        %v502 = vunpack.c.h.b16 %v362
        %v503 = vunpack.c.l.b16 %v363
        %v504 = vunpack.c.h.b16 %v363
        %v505 = vunpack.c.l.b16 %v364
        %v506 = vunpack.c.h.b16 %v364
        %v507 = vunpack.c.l.b16 %v365
        %v508 = vunpack.c.h.b16 %v365
        %v509 = vunpack.c.l.b16 %v366
        %v510 = vunpack.c.h.b16 %v366
        %v511 = vpack.c.b16 %v481, %v479
        %v512 = vpack.c.b16 %v482, %v480
        %v513 = vpack.c.b16 %v485, %v483
        %v514 = vpack.c.b16 %v486, %v484
        %v515 = vpack.c.b16 %v489, %v487
        %v516 = vpack.c.b16 %v490, %v488
        %v517 = vpack.c.b16 %v493, %v491
        %v518 = vpack.c.b16 %v494, %v492
        %v519 = vpack.c.b16 %v497, %v495
        %v520 = vpack.c.b16 %v498, %v496
        %v521 = vpack.c.b16 %v501, %v499
        %v522 = vpack.c.b16 %v502, %v500
        %v523 = vpack.c.b16 %v505, %v503
        %v524 = vpack.c.b16 %v506, %v504
        %v525 = vpack.c.b16 %v509, %v507
        %v526 = vpack.c.b16 %v510, %v508
        %v559 = vunpack.c.l.b16 %v327
        %v560 = vunpack.c.h.b16 %v327
        %v561 = vunpack.c.l.b16 %v328
        %v562 = vunpack.c.h.b16 %v328
        %v563 = vunpack.c.l.b16 %v329
        %v564 = vunpack.c.h.b16 %v329
        %v565 = vunpack.c.l.b16 %v330
        %v566 = vunpack.c.h.b16 %v330
        %v567 = vunpack.c.l.b16 %v331
        %v568 = vunpack.c.h.b16 %v331
        %v569 = vunpack.c.l.b16 %v332
        %v570 = vunpack.c.h.b16 %v332
        %v571 = vunpack.c.l.b16 %v333
        %v572 = vunpack.c.h.b16 %v333
        %v573 = vunpack.c.l.b16 %v334
        %v574 = vunpack.c.h.b16 %v334
        %v575 = vunpack.c.l.b16 %v335
        %v576 = vunpack.c.h.b16 %v335
        %v577 = vunpack.c.l.b16 %v336
        %v578 = vunpack.c.h.b16 %v336
        %v579 = vunpack.c.l.b16 %v337
        %v580 = vunpack.c.h.b16 %v337
        %v581 = vunpack.c.l.b16 %v338
        %v582 = vunpack.c.h.b16 %v338
        %v583 = vunpack.c.l.b16 %v339
        %v584 = vunpack.c.h.b16 %v339
        %v585 = vunpack.c.l.b16 %v340
        %v586 = vunpack.c.h.b16 %v340
        %v587 = vunpack.c.l.b16 %v341
        %v588 = vunpack.c.h.b16 %v341
        %v589 = vunpack.c.l.b16 %v342
        %v590 = vunpack.c.h.b16 %v342
        %v591 = vunpack.c.l.b16 %v343
        %v592 = vunpack.c.h.b16 %v343
        %v593 = vunpack.c.l.b16 %v344
        %v594 = vunpack.c.h.b16 %v344
        %v595 = vunpack.c.l.b16 %v345
        %v596 = vunpack.c.h.b16 %v345
        %v597 = vunpack.c.l.b16 %v346
        %v598 = vunpack.c.h.b16 %v346
        %v599 = vunpack.c.l.b16 %v347
        %v600 = vunpack.c.h.b16 %v347
        %v601 = vunpack.c.l.b16 %v348
        %v602 = vunpack.c.h.b16 %v348
        %v603 = vunpack.c.l.b16 %v349
        %v604 = vunpack.c.h.b16 %v349
        %v605 = vunpack.c.l.b16 %v350
        %v606 = vunpack.c.h.b16 %v350
        %v607 = vpack.c.b16 %v561, %v559
        %v608 = vpack.c.b16 %v562, %v560
        %v609 = vpack.c.b16 %v565, %v563
        %v610 = vpack.c.b16 %v566, %v564
        %v611 = vpack.c.b16 %v569, %v567
        %v612 = vpack.c.b16 %v570, %v568
        %v613 = vpack.c.b16 %v573, %v571
        %v614 = vpack.c.b16 %v574, %v572
        %v615 = vpack.c.b16 %v577, %v575
        %v616 = vpack.c.b16 %v578, %v576
        %v617 = vpack.c.b16 %v581, %v579
        %v618 = vpack.c.b16 %v582, %v580
        %v619 = vpack.c.b16 %v585, %v583
        %v620 = vpack.c.b16 %v586, %v584
        %v621 = vpack.c.b16 %v589, %v587
        %v622 = vpack.c.b16 %v590, %v588
        %v623 = vpack.c.b16 %v593, %v591
        %v624 = vpack.c.b16 %v594, %v592
        %v625 = vpack.c.b16 %v597, %v595
        %v626 = vpack.c.b16 %v598, %v596
        %v627 = vpack.c.b16 %v601, %v599
        %v628 = vpack.c.b16 %v602, %v600
        %v629 = vpack.c.b16 %v605, %v603
        %v630 = vpack.c.b16 %v606, %v604
        %vm655 = vcmask 523264
        %v657 = vsel %vm655, %v512, 0
        %v660 = vsel %vm655, %v514, 0
        %v663 = vsel %vm655, %v516, 0
        %v666 = vsel %vm655, %v518, 0
        %v669 = vsel %vm655, %v520, 0
        %v672 = vsel %vm655, %v522, 0
        %v675 = vsel %vm655, %v524, 0
        %v678 = vsel %vm655, %v526, 0
        %680 = vmatprep.subr.bf16.mxu0 %v608
        %681 = vmatpush1.bf16.msra.mxu0 %v607
        %682 = vmatprep.subr.bf16.mxu0 %v610
        %683 = vmatpush1.bf16.msra.mxu0 %v609
        %684 = vmatprep.subr.bf16.mxu0 %v612
        %685 = vmatpush1.bf16.msra.mxu0 %v611
        %686 = vmatprep.subr.bf16.mxu0 %v614
        %687 = vmatpush1.bf16.msra.mxu0 %v613
        %688 = vmatprep.subr.bf16.mxu0 %v616
        %689 = vmatpush1.bf16.msra.mxu0 %v615
        %690 = vmatprep.subr.bf16.mxu0 %v618
        %691 = vmatpush1.bf16.msra.mxu0 %v617
        %692 = vmatprep.subr.bf16.mxu0 %v620
        %693 = vmatpush1.bf16.msra.mxu0 %v619
        %694 = vmatprep.subr.bf16.mxu0 %v622
        %695 = vmatpush1.bf16.msra.mxu0 %v621
        %696 = vmatprep.subr.bf16.mxu0 %v624
        %697 = vmatpush1.bf16.msra.mxu0 %v623
        %698 = vmatprep.subr.bf16.mxu0 %v626
        %699 = vmatpush1.bf16.msra.mxu0 %v625
        %700 = vmatprep.subr.bf16.mxu0 %v628
        %701 = vmatpush1.bf16.msra.mxu0 %v627
        %702 = vmatprep.subr.bf16.mxu0 %v630
        %703 = vmatpush1.bf16.msra.mxu0 %v629
        %704 = vmatprep.subr.bf16.mxu0 0
        %705 = vmatpush1.bf16.msra.mxu0 0
        %706 = vmatprep.subr.bf16.mxu0 0
        %707 = vmatpush1.bf16.msra.mxu0 0
        %708 = vmatprep.subr.bf16.mxu0 0
        %709 = vmatpush1.bf16.msra.mxu0 0
        %710 = vmatprep.subr.bf16.mxu0 0
        %711 = vmatpush1.bf16.msra.mxu0 0
        %712 = vmatprep.mubr.bf16.mxu0 %v657
        %713 = vmatmul.mubr.bf16.gmra.mrb[0].mxu0 %v511
        %v714 = vpop.f32.mrb[0].mxu0
        %v715 = vadd.f32 %v386, %v714
        %v716 = vpop.f32.mrb[0].mxu0
        %v717 = vadd.f32 %v386, %v716
        %v718 = vpop.f32.mrb[0].mxu0
        %v719 = vadd.f32 %v391, %v718
        %v720 = vpop.f32.mrb[0].mxu0
        %v721 = vadd.f32 %v391, %v720
        %722 = vmatprep.mubr.bf16.mxu0 %v660
        %723 = vmatmul.mubr.bf16.gmra.mrb[0].mxu0 %v513
        %v724 = vpop.f32.mrb[0].mxu0
        %v725 = vadd.f32 %v396, %v724
        %v726 = vpop.f32.mrb[0].mxu0
        %v727 = vadd.f32 %v396, %v726
        %v728 = vpop.f32.mrb[0].mxu0
        %v729 = vadd.f32 %v401, %v728
        %v730 = vpop.f32.mrb[0].mxu0
        %v731 = vadd.f32 %v401, %v730
        %732 = vmatprep.mubr.bf16.mxu0 %v663
        %733 = vmatmul.mubr.bf16.gmra.mrb[0].mxu0 %v515
        %v734 = vpop.f32.mrb[0].mxu0
        %v735 = vadd.f32 %v406, %v734
        %v736 = vpop.f32.mrb[0].mxu0
        %v737 = vadd.f32 %v406, %v736
        %v738 = vpop.f32.mrb[0].mxu0
        %v739 = vadd.f32 %v411, %v738
        %v740 = vpop.f32.mrb[0].mxu0
        %v741 = vadd.f32 %v411, %v740
        %742 = vmatprep.mubr.bf16.mxu0 %v666
        %743 = vmatmul.mubr.bf16.gmra.mrb[0].mxu0 %v517
        %v744 = vpop.f32.mrb[0].mxu0
        %v745 = vadd.f32 %v416, %v744
        %v746 = vpop.f32.mrb[0].mxu0
        %v747 = vadd.f32 %v416, %v746
        %v748 = vpop.f32.mrb[0].mxu0
        %v749 = vadd.f32 %v421, %v748
        %v750 = vpop.f32.mrb[0].mxu0
        %v751 = vadd.f32 %v421, %v750
        %752 = vmatprep.mubr.bf16.mxu0 %v669
        %753 = vmatmul.mubr.bf16.gmra.mrb[0].mxu0 %v519
        %v754 = vpop.f32.mrb[0].mxu0
        %v755 = vadd.f32 %v426, %v754
        %v756 = vpop.f32.mrb[0].mxu0
        %v757 = vadd.f32 %v426, %v756
        %v758 = vpop.f32.mrb[0].mxu0
        %v759 = vadd.f32 %v431, %v758
        %v760 = vpop.f32.mrb[0].mxu0
        %v761 = vadd.f32 %v431, %v760
        %762 = vmatprep.mubr.bf16.mxu0 %v672
        %763 = vmatmul.mubr.bf16.gmra.mrb[0].mxu0 %v521
        %v764 = vpop.f32.mrb[0].mxu0
        %v765 = vadd.f32 %v436, %v764
        %v766 = vpop.f32.mrb[0].mxu0
        %v767 = vadd.f32 %v436, %v766
        %v768 = vpop.f32.mrb[0].mxu0
        %v769 = vadd.f32 %v441, %v768
        %v770 = vpop.f32.mrb[0].mxu0
        %v771 = vadd.f32 %v441, %v770
        %772 = vmatprep.mubr.bf16.mxu0 %v675
        %773 = vmatmul.mubr.bf16.gmra.mrb[0].mxu0 %v523
        %v774 = vpop.f32.mrb[0].mxu0
        %v775 = vadd.f32 %v446, %v774
        %v776 = vpop.f32.mrb[0].mxu0
        %v777 = vadd.f32 %v446, %v776
        %v778 = vpop.f32.mrb[0].mxu0
        %v779 = vadd.f32 %v451, %v778
        %v780 = vpop.f32.mrb[0].mxu0
        %v781 = vadd.f32 %v451, %v780
        %782 = vmatprep.mubr.bf16.mxu0 %v678
        %783 = vmatmul.mubr.bf16.gmra.mrb[0].mxu0 %v525
        %v784 = vpop.f32.mrb[0].mxu0
        %v785 = vadd.f32 %v456, %v784
        %v786 = vpop.f32.mrb[0].mxu0
        %v787 = vadd.f32 %v456, %v786
        %v788 = vpop.f32.mrb[0].mxu0
        %v789 = vadd.f32 %v461, %v788
        %v790 = vpop.f32.mrb[0].mxu0
        %v791 = vadd.f32 %v461, %v790
        %792 = vdwg.mxu0
        %v793 = vmul.f32 %v715, 0.5
        %v794 = vmul.f32 %v717, 0.5
        %v795 = vmul.f32 %v719, 0.5
        %v796 = vmul.f32 %v721, 0.5
        %v797 = vmul.f32 %v725, 0.5
        %v798 = vmul.f32 %v727, 0.5
        %v799 = vmul.f32 %v729, 0.5
        %v800 = vmul.f32 %v731, 0.5
        %v801 = vmul.f32 %v735, 0.5
        %v802 = vmul.f32 %v737, 0.5
        %v803 = vmul.f32 %v739, 0.5
        %v804 = vmul.f32 %v741, 0.5
        %v805 = vmul.f32 %v745, 0.5
        %v806 = vmul.f32 %v747, 0.5
        %v807 = vmul.f32 %v749, 0.5
        %v808 = vmul.f32 %v751, 0.5
        %v809 = vmul.f32 %v755, 0.5
        %v810 = vmul.f32 %v757, 0.5
        %v811 = vmul.f32 %v759, 0.5
        %v812 = vmul.f32 %v761, 0.5
        %v813 = vmul.f32 %v765, 0.5
        %v814 = vmul.f32 %v767, 0.5
        %v815 = vmul.f32 %v769, 0.5
        %v816 = vmul.f32 %v771, 0.5
        %v817 = vmul.f32 %v775, 0.5
        %v818 = vmul.f32 %v777, 0.5
        %v819 = vmul.f32 %v779, 0.5
        %v820 = vmul.f32 %v781, 0.5
        %v821 = vmul.f32 %v785, 0.5
        %v822 = vmul.f32 %v787, 0.5
        %v823 = vmul.f32 %v789, 0.5
        %v824 = vmul.f32 %v791, 0.5
        %v825 = vmul.f32 %v715, 0.70710677
        %v826 = vmul.f32 %v717, 0.70710677
        %v827 = vmul.f32 %v719, 0.70710677
        %v828 = vmul.f32 %v721, 0.70710677
        %v829 = vmul.f32 %v725, 0.70710677
        %v830 = vmul.f32 %v727, 0.70710677
        %v831 = vmul.f32 %v729, 0.70710677
        %v832 = vmul.f32 %v731, 0.70710677
        %v833 = vmul.f32 %v735, 0.70710677
        %v834 = vmul.f32 %v737, 0.70710677
        %v835 = vmul.f32 %v739, 0.70710677
        %v836 = vmul.f32 %v741, 0.70710677
        %v837 = vmul.f32 %v745, 0.70710677
        %v838 = vmul.f32 %v747, 0.70710677
        %v839 = vmul.f32 %v749, 0.70710677
        %v840 = vmul.f32 %v751, 0.70710677
        %v841 = vmul.f32 %v755, 0.70710677
        %v842 = vmul.f32 %v757, 0.70710677
        %v843 = vmul.f32 %v759, 0.70710677
        %v844 = vmul.f32 %v761, 0.70710677
        %v845 = vmul.f32 %v765, 0.70710677
        %v846 = vmul.f32 %v767, 0.70710677
        %v847 = vmul.f32 %v769, 0.70710677
        %v848 = vmul.f32 %v771, 0.70710677
        %v849 = vmul.f32 %v775, 0.70710677
        %v850 = vmul.f32 %v777, 0.70710677
        %v851 = vmul.f32 %v779, 0.70710677
        %v852 = vmul.f32 %v781, 0.70710677
        %v853 = vmul.f32 %v785, 0.70710677
        %v854 = vmul.f32 %v787, 0.70710677
        %v855 = vmul.f32 %v789, 0.70710677
        %v856 = vmul.f32 %v791, 0.70710677
        %v857 = verf.f32.pop %v825
        %v858 = verf.f32.pop %v826
        %v859 = verf.f32.pop %v827
        %v860 = verf.f32.pop %v828
        %v861 = verf.f32.pop %v829
        %v862 = verf.f32.pop %v830
        %v863 = verf.f32.pop %v831
        %v864 = verf.f32.pop %v832
        %v865 = verf.f32.pop %v833
        %v866 = verf.f32.pop %v834
        %v867 = verf.f32.pop %v835
        %v868 = verf.f32.pop %v836
        %v869 = verf.f32.pop %v837
        %v870 = verf.f32.pop %v838
        %v871 = verf.f32.pop %v839
        %v872 = verf.f32.pop %v840
        %v873 = verf.f32.pop %v841
        %v874 = verf.f32.pop %v842
        %v875 = verf.f32.pop %v843
        %v876 = verf.f32.pop %v844
        %v877 = verf.f32.pop %v845
        %v878 = verf.f32.pop %v846
        %v879 = verf.f32.pop %v847
        %v880 = verf.f32.pop %v848
        %v881 = verf.f32.pop %v849
        %v882 = verf.f32.pop %v850
        %v883 = verf.f32.pop %v851
        %v884 = verf.f32.pop %v852
        %v885 = verf.f32.pop %v853
        %v886 = verf.f32.pop %v854
        %v887 = verf.f32.pop %v855
        %v888 = verf.f32.pop %v856
        %v889 = vadd.f32 %v857, 1.0
        %v890 = vadd.f32 %v858, 1.0
        %v891 = vadd.f32 %v859, 1.0
        %v892 = vadd.f32 %v860, 1.0
        %v893 = vadd.f32 %v861, 1.0
        %v894 = vadd.f32 %v862, 1.0
        %v895 = vadd.f32 %v863, 1.0
        %v896 = vadd.f32 %v864, 1.0
        %v897 = vadd.f32 %v865, 1.0
        %v898 = vadd.f32 %v866, 1.0
        %v899 = vadd.f32 %v867, 1.0
        %v900 = vadd.f32 %v868, 1.0
        %v901 = vadd.f32 %v869, 1.0
        %v902 = vadd.f32 %v870, 1.0
        %v903 = vadd.f32 %v871, 1.0
        %v904 = vadd.f32 %v872, 1.0
        %v905 = vadd.f32 %v873, 1.0
        %v906 = vadd.f32 %v874, 1.0
        %v907 = vadd.f32 %v875, 1.0
        %v908 = vadd.f32 %v876, 1.0
        %v909 = vadd.f32 %v877, 1.0
        %v910 = vadd.f32 %v878, 1.0
        %v911 = vadd.f32 %v879, 1.0
        %v912 = vadd.f32 %v880, 1.0
        %v913 = vadd.f32 %v881, 1.0
        %v914 = vadd.f32 %v882, 1.0
        %v915 = vadd.f32 %v883, 1.0
        %v916 = vadd.f32 %v884, 1.0
        %v917 = vadd.f32 %v885, 1.0
        %v918 = vadd.f32 %v886, 1.0
        %v919 = vadd.f32 %v887, 1.0
        %v920 = vadd.f32 %v888, 1.0
        %v921 = vmul.f32 %v793, %v889
        %v922 = vmul.f32 %v794, %v890
        %v923 = vmul.f32 %v795, %v891
        %v924 = vmul.f32 %v796, %v892
        %v925 = vmul.f32 %v797, %v893
        %v926 = vmul.f32 %v798, %v894
        %v927 = vmul.f32 %v799, %v895
        %v928 = vmul.f32 %v800, %v896
        %v929 = vmul.f32 %v801, %v897
        %v930 = vmul.f32 %v802, %v898
        %v931 = vmul.f32 %v803, %v899
        %v932 = vmul.f32 %v804, %v900
        %v933 = vmul.f32 %v805, %v901
        %v934 = vmul.f32 %v806, %v902
        %v935 = vmul.f32 %v807, %v903
        %v936 = vmul.f32 %v808, %v904
        %v937 = vmul.f32 %v809, %v905
        %v938 = vmul.f32 %v810, %v906
        %v939 = vmul.f32 %v811, %v907
        %v940 = vmul.f32 %v812, %v908
        %v941 = vmul.f32 %v813, %v909
        %v942 = vmul.f32 %v814, %v910
        %v943 = vmul.f32 %v815, %v911
        %v944 = vmul.f32 %v816, %v912
        %v945 = vmul.f32 %v817, %v913
        %v946 = vmul.f32 %v818, %v914
        %v947 = vmul.f32 %v819, %v915
        %v948 = vmul.f32 %v820, %v916
        %v949 = vmul.f32 %v821, %v917
        %v950 = vmul.f32 %v822, %v918
        %v951 = vmul.f32 %v823, %v919
        %v952 = vmul.f32 %v824, %v920
        %v953 = vpack.c.bf16 %v923, %v921
        %v954 = vpack.c.bf16 %v924, %v922
        %v955 = vpack.c.bf16 %v927, %v925
        %v956 = vpack.c.bf16 %v928, %v926
        %v957 = vpack.c.bf16 %v931, %v929
        %v958 = vpack.c.bf16 %v932, %v930
        %v959 = vpack.c.bf16 %v935, %v933
        %v960 = vpack.c.bf16 %v936, %v934
        %v961 = vpack.c.bf16 %v939, %v937
        %v962 = vpack.c.bf16 %v940, %v938
        %v963 = vpack.c.bf16 %v943, %v941
        %v964 = vpack.c.bf16 %v944, %v942
        %v965 = vpack.c.bf16 %v947, %v945
        %v966 = vpack.c.bf16 %v948, %v946
        %v967 = vpack.c.bf16 %v951, %v949
        %v968 = vpack.c.bf16 %v952, %v950
        %v969 = vld [vmem:[%s4] sm:$0xf]
        %v970 = vld [vmem:[%s4 + $0x4] sm:$0xf]
        %v971 = vld [vmem:[%s4 + $0x8] sm:$0xf]
        %v972 = vld [vmem:[%s4 + $0xc] sm:$0xf]
        %v973 = vld [vmem:[%s4 + $0x10] sm:$0xf]
        %v974 = vld [vmem:[%s4 + $0x14] sm:$0xf]
        %v975 = vld [vmem:[%s4 + $0x18] sm:$0xf]
        %v976 = vld [vmem:[%s4 + $0x1c] sm:$0xf]
        %v977 = vld [vmem:[%s4 + $0x20] sm:$0xf]
        %v978 = vld [vmem:[%s4 + $0x24] sm:$0xf]
        %v979 = vld [vmem:[%s4 + $0x28] sm:$0xf]
        %v980 = vld [vmem:[%s4 + $0x2c] sm:$0xf]
        %v981 = vld [vmem:[%s4 + $0x30] sm:$0xf]
        %v982 = vld [vmem:[%s4 + $0x34] sm:$0xf]
        %v983 = vld [vmem:[%s4 + $0x38] sm:$0xf]
        %v984 = vld [vmem:[%s4 + $0x3c] sm:$0xf]
        %v985 = vld [vmem:[%s4 + $0x40] sm:$0xf]
        %v986 = vld [vmem:[%s4 + $0x44] sm:$0xf]
        %v987 = vld [vmem:[%s4 + $0x48] sm:$0xf]
        %v988 = vld [vmem:[%s4 + $0x4c] sm:$0xf]
        %v989 = vld [vmem:[%s4 + $0x50] sm:$0xf]
        %v990 = vld [vmem:[%s4 + $0x54] sm:$0xf]
        %v991 = vld [vmem:[%s4 + $0x58] sm:$0xf]
        %v992 = vld [vmem:[%s4 + $0x5c] sm:$0xf]
        %v993 = vld [vmem:[%s4 + $0x60] sm:$0xf]
        %v994 = vld [vmem:[%s4 + $0x64] sm:$0xf]
        %v995 = vld [vmem:[%s4 + $0x68] sm:$0xf]
        %v996 = vld [vmem:[%s4 + $0x6c] sm:$0xf]
        %v997 = vld [vmem:[%s4 + $0x70] sm:$0xf]
        %v998 = vld [vmem:[%s4 + $0x74] sm:$0xf]
        %v999 = vld [vmem:[%s4 + $0x78] sm:$0xf]
        %v1000 = vld [vmem:[%s4 + $0x7c] sm:$0xf]
        %v1001 = vld [vmem:[%s4 + $0x80] sm:$0xf]
        %v1002 = vld [vmem:[%s4 + $0x84] sm:$0xf]
        %v1003 = vld [vmem:[%s4 + $0x88] sm:$0xf]
        %v1004 = vld [vmem:[%s4 + $0x8c] sm:$0xf]
        %v1005 = vld [vmem:[%s4 + $0x90] sm:$0xf]
        %v1006 = vld [vmem:[%s4 + $0x94] sm:$0xf]
        %v1007 = vld [vmem:[%s4 + $0x98] sm:$0xf]
        %v1008 = vld [vmem:[%s4 + $0x9c] sm:$0xf]
        %v1009 = vld [vmem:[%s4 + $0xa0] sm:$0xf]
        %v1010 = vld [vmem:[%s4 + $0xa4] sm:$0xf]
        %v1011 = vld [vmem:[%s4 + $0xa8] sm:$0xf]
        %v1012 = vld [vmem:[%s4 + $0xac] sm:$0xf]
        %v1013 = vld [vmem:[%s4 + $0xb0] sm:$0xf]
        %v1014 = vld [vmem:[%s4 + $0xb4] sm:$0xf]
        %v1015 = vld [vmem:[%s4 + $0xb8] sm:$0xf]
        %v1016 = vld [vmem:[%s4 + $0xbc] sm:$0xf]
        %v1017 = vld [vmem:[%s4 + $0xc0] sm:$0xf]
        %v1018 = vld [vmem:[%s4 + $0xc4] sm:$0xf]
        %v1019 = vld [vmem:[%s4 + $0xc8] sm:$0xf]
        %v1020 = vld [vmem:[%s4 + $0xcc] sm:$0xf]
        %v1021 = vld [vmem:[%s4 + $0xd0] sm:$0xf]
        %v1022 = vld [vmem:[%s4 + $0xd4] sm:$0xf]
        %v1023 = vld [vmem:[%s4 + $0xd8] sm:$0xf]
        %v1024 = vld [vmem:[%s4 + $0xdc] sm:$0xf]
        %v1025 = vld [vmem:[%s4 + $0xe0] sm:$0xf]
        %v1026 = vld [vmem:[%s4 + $0xe4] sm:$0xf]
        %v1027 = vld [vmem:[%s4 + $0xe8] sm:$0xf]
        %v1028 = vld [vmem:[%s4 + $0xec] sm:$0xf]
        %v1029 = vld [vmem:[%s4 + $0xf0] sm:$0xf]
        %v1030 = vld [vmem:[%s4 + $0xf4] sm:$0xf]
        %v1031 = vld [vmem:[%s4 + $0xf8] sm:$0xf]
        %v1032 = vld [vmem:[%s4 + $0xfc] sm:$0xf]
        %v1033 = vld [vmem:[%s5] sm:$0xff]
        %v1034 = vld [vmem:[%s5 + $0x8] sm:$0xff]
        %v1035 = vld [vmem:[%s5 + $0x10] sm:$0xff]
        %v1036 = vld [vmem:[%s5 + $0x18] sm:$0xff]
        %v1037 = vld [vmem:[%s5 + $0x20] sm:$0xff]
        %v1038 = vld [vmem:[%s5 + $0x28] sm:$0xff]
        %v1039 = vld [vmem:[%s5 + $0x30] sm:$0xff]
        %v1040 = vld [vmem:[%s5 + $0x38] sm:$0xff]
        %v1041 = vld [vmem:[%s5 + $0x40] sm:$0xff]
        %v1042 = vld [vmem:[%s5 + $0x48] sm:$0xff]
        %v1043 = vld [vmem:[%s5 + $0x50] sm:$0xff]
        %v1044 = vld [vmem:[%s5 + $0x58] sm:$0xff]
        %v1045 = vld [vmem:[%s5 + $0x60] sm:$0xff]
        %v1046 = vld [vmem:[%s5 + $0x68] sm:$0xff]
        %v1047 = vld [vmem:[%s5 + $0x70] sm:$0xff]
        %v1048 = vld [vmem:[%s5 + $0x78] sm:$0xff]
        %v1049 = vld [vmem:[%s5 + $0x80] sm:$0xff]
        %v1050 = vld [vmem:[%s5 + $0x88] sm:$0xff]
        %v1051 = vld [vmem:[%s5 + $0x90] sm:$0xff]
        %v1052 = vld [vmem:[%s5 + $0x98] sm:$0xff]
        %v1053 = vld [vmem:[%s5 + $0xa0] sm:$0xff]
        %v1054 = vld [vmem:[%s5 + $0xa8] sm:$0xff]
        %v1055 = vld [vmem:[%s5 + $0xb0] sm:$0xff]
        %v1056 = vld [vmem:[%s5 + $0xb8] sm:$0xff]
        %v1057 = vld [vmem:[%s5 + $0xc0] sm:$0xff]
        %v1058 = vld [vmem:[%s5 + $0xc8] sm:$0xff]
        %v1059 = vld [vmem:[%s5 + $0xd0] sm:$0xff]
        %v1060 = vld [vmem:[%s5 + $0xd8] sm:$0xff]
        %v1061 = vld [vmem:[%s5 + $0xe0] sm:$0xff]
        %v1062 = vld [vmem:[%s5 + $0xe8] sm:$0xff]
        %v1063 = vld [vmem:[%s5 + $0xf0] sm:$0xff]
        %v1064 = vld [vmem:[%s5 + $0xf8] sm:$0xff]
        %v1065 = vld [vmem:[%s5 + $0x100] sm:$0xff]
        %v1066 = vld [vmem:[%s5 + $0x108] sm:$0xff]
        %v1067 = vld [vmem:[%s5 + $0x110] sm:$0xff]
        %v1068 = vld [vmem:[%s5 + $0x118] sm:$0xff]
        %v1069 = vld [vmem:[%s5 + $0x120] sm:$0xff]
        %v1070 = vld [vmem:[%s5 + $0x128] sm:$0xff]
        %v1071 = vld [vmem:[%s5 + $0x130] sm:$0xff]
        %v1072 = vld [vmem:[%s5 + $0x138] sm:$0xff]
        %v1073 = vld [vmem:[%s5 + $0x140] sm:$0xff]
        %v1074 = vld [vmem:[%s5 + $0x148] sm:$0xff]
        %v1075 = vld [vmem:[%s5 + $0x150] sm:$0xff]
        %v1076 = vld [vmem:[%s5 + $0x158] sm:$0xff]
        %v1077 = vld [vmem:[%s5 + $0x160] sm:$0xff]
        %v1078 = vld [vmem:[%s5 + $0x168] sm:$0xff]
        %v1079 = vld [vmem:[%s5 + $0x170] sm:$0xff]
        %v1080 = vld [vmem:[%s5 + $0x178] sm:$0xff]
        %v1081 = vld [vmem:[%s5 + $0x180] sm:$0xff]
        %v1082 = vld [vmem:[%s5 + $0x188] sm:$0xff]
        %v1083 = vld [vmem:[%s5 + $0x190] sm:$0xff]
        %v1084 = vld [vmem:[%s5 + $0x198] sm:$0xff]
        %v1085 = vld [vmem:[%s5 + $0x1a0] sm:$0xff]
        %v1086 = vld [vmem:[%s5 + $0x1a8] sm:$0xff]
        %v1087 = vld [vmem:[%s5 + $0x1b0] sm:$0xff]
        %v1088 = vld [vmem:[%s5 + $0x1b8] sm:$0xff]
        %v1089 = vld [vmem:[%s5 + $0x1c0] sm:$0xff]
        %v1090 = vld [vmem:[%s5 + $0x1c8] sm:$0xff]
        %v1091 = vld [vmem:[%s5 + $0x1d0] sm:$0xff]
        %v1092 = vld [vmem:[%s5 + $0x1d8] sm:$0xff]
        %v1093 = vld [vmem:[%s5 + $0x1e0] sm:$0xff]
        %v1094 = vld [vmem:[%s5 + $0x1e8] sm:$0xff]
        %v1095 = vld [vmem:[%s5 + $0x1f0] sm:$0xff]
        %v1096 = vld [vmem:[%s5 + $0x1f8] sm:$0xff]
        %1098 = vset.pattern.permute.xlu0 0
        %1099 = vperm.xlu0 %1098, %v1033
        %v1100 = vpop.permute.xlu0 %1099
        %1103 = vset.pattern.permute.xlu0 0
        %1104 = vperm.xlu0 %1103, %v1034
        %v1105 = vpop.permute.xlu0 %1104
        %1108 = vset.pattern.permute.xlu0 0
        %1109 = vperm.xlu0 %1108, %v1035
        %v1110 = vpop.permute.xlu0 %1109
        %1113 = vset.pattern.permute.xlu0 0
        %1114 = vperm.xlu0 %1113, %v1036
        %v1115 = vpop.permute.xlu0 %1114
        %1118 = vset.pattern.permute.xlu0 0
        %1119 = vperm.xlu0 %1118, %v1037
        %v1120 = vpop.permute.xlu0 %1119
        %1123 = vset.pattern.permute.xlu0 0
        %1124 = vperm.xlu0 %1123, %v1038
        %v1125 = vpop.permute.xlu0 %1124
        %1128 = vset.pattern.permute.xlu0 0
        %1129 = vperm.xlu0 %1128, %v1039
        %v1130 = vpop.permute.xlu0 %1129
        %1133 = vset.pattern.permute.xlu0 0
        %1134 = vperm.xlu0 %1133, %v1040
        %v1135 = vpop.permute.xlu0 %1134
        %1138 = vset.pattern.permute.xlu0 0
        %1139 = vperm.xlu0 %1138, %v1041
        %v1140 = vpop.permute.xlu0 %1139
        %1143 = vset.pattern.permute.xlu0 0
        %1144 = vperm.xlu0 %1143, %v1042
        %v1145 = vpop.permute.xlu0 %1144
        %1148 = vset.pattern.permute.xlu0 0
        %1149 = vperm.xlu0 %1148, %v1043
        %v1150 = vpop.permute.xlu0 %1149
        %1153 = vset.pattern.permute.xlu0 0
        %1154 = vperm.xlu0 %1153, %v1044
        %v1155 = vpop.permute.xlu0 %1154
        %1158 = vset.pattern.permute.xlu0 0
        %1159 = vperm.xlu0 %1158, %v1045
        %v1160 = vpop.permute.xlu0 %1159
        %1163 = vset.pattern.permute.xlu0 0
        %1164 = vperm.xlu0 %1163, %v1046
        %v1165 = vpop.permute.xlu0 %1164
        %1168 = vset.pattern.permute.xlu0 0
        %1169 = vperm.xlu0 %1168, %v1047
        %v1170 = vpop.permute.xlu0 %1169
        %1173 = vset.pattern.permute.xlu0 0
        %1174 = vperm.xlu0 %1173, %v1048
        %v1175 = vpop.permute.xlu0 %1174
        %1178 = vset.pattern.permute.xlu0 0
        %1179 = vperm.xlu0 %1178, %v1049
        %v1180 = vpop.permute.xlu0 %1179
        %1183 = vset.pattern.permute.xlu0 0
        %1184 = vperm.xlu0 %1183, %v1050
        %v1185 = vpop.permute.xlu0 %1184
        %1188 = vset.pattern.permute.xlu0 0
        %1189 = vperm.xlu0 %1188, %v1051
        %v1190 = vpop.permute.xlu0 %1189
        %1193 = vset.pattern.permute.xlu0 0
        %1194 = vperm.xlu0 %1193, %v1052
        %v1195 = vpop.permute.xlu0 %1194
        %1198 = vset.pattern.permute.xlu0 0
        %1199 = vperm.xlu0 %1198, %v1053
        %v1200 = vpop.permute.xlu0 %1199
        %1203 = vset.pattern.permute.xlu0 0
        %1204 = vperm.xlu0 %1203, %v1054
        %v1205 = vpop.permute.xlu0 %1204
        %1208 = vset.pattern.permute.xlu0 0
        %1209 = vperm.xlu0 %1208, %v1055
        %v1210 = vpop.permute.xlu0 %1209
        %1213 = vset.pattern.permute.xlu0 0
        %1214 = vperm.xlu0 %1213, %v1056
        %v1215 = vpop.permute.xlu0 %1214
        %1218 = vset.pattern.permute.xlu0 0
        %1219 = vperm.xlu0 %1218, %v1057
        %v1220 = vpop.permute.xlu0 %1219
        %1223 = vset.pattern.permute.xlu0 0
        %1224 = vperm.xlu0 %1223, %v1058
        %v1225 = vpop.permute.xlu0 %1224
        %1228 = vset.pattern.permute.xlu0 0
        %1229 = vperm.xlu0 %1228, %v1059
        %v1230 = vpop.permute.xlu0 %1229
        %1233 = vset.pattern.permute.xlu0 0
        %1234 = vperm.xlu0 %1233, %v1060
        %v1235 = vpop.permute.xlu0 %1234
        %1238 = vset.pattern.permute.xlu0 0
        %1239 = vperm.xlu0 %1238, %v1061
        %v1240 = vpop.permute.xlu0 %1239
        %1243 = vset.pattern.permute.xlu0 0
        %1244 = vperm.xlu0 %1243, %v1062
        %v1245 = vpop.permute.xlu0 %1244
        %1248 = vset.pattern.permute.xlu0 0
        %1249 = vperm.xlu0 %1248, %v1063
        %v1250 = vpop.permute.xlu0 %1249
        %1253 = vset.pattern.permute.xlu0 0
        %1254 = vperm.xlu0 %1253, %v1064
        %v1255 = vpop.permute.xlu0 %1254
        %1258 = vset.pattern.permute.xlu0 0
        %1259 = vperm.xlu0 %1258, %v1065
        %v1260 = vpop.permute.xlu0 %1259
        %1263 = vset.pattern.permute.xlu0 0
        %1264 = vperm.xlu0 %1263, %v1066
        %v1265 = vpop.permute.xlu0 %1264
        %1268 = vset.pattern.permute.xlu0 0
        %1269 = vperm.xlu0 %1268, %v1067
        %v1270 = vpop.permute.xlu0 %1269
        %1273 = vset.pattern.permute.xlu0 0
        %1274 = vperm.xlu0 %1273, %v1068
        %v1275 = vpop.permute.xlu0 %1274
        %1278 = vset.pattern.permute.xlu0 0
        %1279 = vperm.xlu0 %1278, %v1069
        %v1280 = vpop.permute.xlu0 %1279
        %1283 = vset.pattern.permute.xlu0 0
        %1284 = vperm.xlu0 %1283, %v1070
        %v1285 = vpop.permute.xlu0 %1284
        %1288 = vset.pattern.permute.xlu0 0
        %1289 = vperm.xlu0 %1288, %v1071
        %v1290 = vpop.permute.xlu0 %1289
        %1293 = vset.pattern.permute.xlu0 0
        %1294 = vperm.xlu0 %1293, %v1072
        %v1295 = vpop.permute.xlu0 %1294
        %1298 = vset.pattern.permute.xlu0 0
        %1299 = vperm.xlu0 %1298, %v1073
        %v1300 = vpop.permute.xlu0 %1299
        %1303 = vset.pattern.permute.xlu0 0
        %1304 = vperm.xlu0 %1303, %v1074
        %v1305 = vpop.permute.xlu0 %1304
        %1308 = vset.pattern.permute.xlu0 0
        %1309 = vperm.xlu0 %1308, %v1075
        %v1310 = vpop.permute.xlu0 %1309
        %1313 = vset.pattern.permute.xlu0 0
        %1314 = vperm.xlu0 %1313, %v1076
        %v1315 = vpop.permute.xlu0 %1314
        %1318 = vset.pattern.permute.xlu0 0
        %1319 = vperm.xlu0 %1318, %v1077
        %v1320 = vpop.permute.xlu0 %1319
        %1323 = vset.pattern.permute.xlu0 0
        %1324 = vperm.xlu0 %1323, %v1078
        %v1325 = vpop.permute.xlu0 %1324
        %1328 = vset.pattern.permute.xlu0 0
        %1329 = vperm.xlu0 %1328, %v1079
        %v1330 = vpop.permute.xlu0 %1329
        %1333 = vset.pattern.permute.xlu0 0
        %1334 = vperm.xlu0 %1333, %v1080
        %v1335 = vpop.permute.xlu0 %1334
        %1338 = vset.pattern.permute.xlu0 0
        %1339 = vperm.xlu0 %1338, %v1081
        %v1340 = vpop.permute.xlu0 %1339
        %1343 = vset.pattern.permute.xlu0 0
        %1344 = vperm.xlu0 %1343, %v1082
        %v1345 = vpop.permute.xlu0 %1344
        %1348 = vset.pattern.permute.xlu0 0
        %1349 = vperm.xlu0 %1348, %v1083
        %v1350 = vpop.permute.xlu0 %1349
        %1353 = vset.pattern.permute.xlu0 0
        %1354 = vperm.xlu0 %1353, %v1084
        %v1355 = vpop.permute.xlu0 %1354
        %1358 = vset.pattern.permute.xlu0 0
        %1359 = vperm.xlu0 %1358, %v1085
        %v1360 = vpop.permute.xlu0 %1359
        %1363 = vset.pattern.permute.xlu0 0
        %1364 = vperm.xlu0 %1363, %v1086
        %v1365 = vpop.permute.xlu0 %1364
        %1368 = vset.pattern.permute.xlu0 0
        %1369 = vperm.xlu0 %1368, %v1087
        %v1370 = vpop.permute.xlu0 %1369
        %1373 = vset.pattern.permute.xlu0 0
        %1374 = vperm.xlu0 %1373, %v1088
        %v1375 = vpop.permute.xlu0 %1374
        %1378 = vset.pattern.permute.xlu0 0
        %1379 = vperm.xlu0 %1378, %v1089
        %v1380 = vpop.permute.xlu0 %1379
        %1383 = vset.pattern.permute.xlu0 0
        %1384 = vperm.xlu0 %1383, %v1090
        %v1385 = vpop.permute.xlu0 %1384
        %1388 = vset.pattern.permute.xlu0 0
        %1389 = vperm.xlu0 %1388, %v1091
        %v1390 = vpop.permute.xlu0 %1389
        %1393 = vset.pattern.permute.xlu0 0
        %1394 = vperm.xlu0 %1393, %v1092
        %v1395 = vpop.permute.xlu0 %1394
        %1398 = vset.pattern.permute.xlu0 0
        %1399 = vperm.xlu0 %1398, %v1093
        %v1400 = vpop.permute.xlu0 %1399
        %1403 = vset.pattern.permute.xlu0 0
        %1404 = vperm.xlu0 %1403, %v1094
        %v1405 = vpop.permute.xlu0 %1404
        %1408 = vset.pattern.permute.xlu0 0
        %1409 = vperm.xlu0 %1408, %v1095
        %v1410 = vpop.permute.xlu0 %1409
        %1413 = vset.pattern.permute.xlu0 0
        %1414 = vperm.xlu0 %1413, %v1096
        %v1415 = vpop.permute.xlu0 %1414
        %v1481 = vunpack.c.l.b16 %v969
        %v1482 = vunpack.c.l.b16 %v970
        %v1483 = vunpack.c.l.b16 %v971
        %v1484 = vunpack.c.l.b16 %v972
        %v1485 = vunpack.c.l.b16 %v973
        %v1486 = vunpack.c.l.b16 %v974
        %v1487 = vunpack.c.l.b16 %v975
        %v1488 = vunpack.c.l.b16 %v976
        %v1489 = vunpack.c.l.b16 %v977
        %v1490 = vunpack.c.l.b16 %v978
        %v1491 = vunpack.c.l.b16 %v979
        %v1492 = vunpack.c.l.b16 %v980
        %v1493 = vunpack.c.l.b16 %v981
        %v1494 = vunpack.c.l.b16 %v982
        %v1495 = vunpack.c.l.b16 %v983
        %v1496 = vunpack.c.l.b16 %v984
        %v1497 = vunpack.c.l.b16 %v985
        %v1498 = vunpack.c.l.b16 %v986
        %v1499 = vunpack.c.l.b16 %v987
        %v1500 = vunpack.c.l.b16 %v988
        %v1501 = vunpack.c.l.b16 %v989
        %v1502 = vunpack.c.l.b16 %v990
        %v1503 = vunpack.c.l.b16 %v991
        %v1504 = vunpack.c.l.b16 %v992
        %v1505 = vunpack.c.l.b16 %v993
        %v1506 = vunpack.c.l.b16 %v994
        %v1507 = vunpack.c.l.b16 %v995
        %v1508 = vunpack.c.l.b16 %v996
        %v1509 = vunpack.c.l.b16 %v997
        %v1510 = vunpack.c.l.b16 %v998
        %v1511 = vunpack.c.l.b16 %v999
        %v1512 = vunpack.c.l.b16 %v1000
        %v1513 = vunpack.c.l.b16 %v1001
        %v1514 = vunpack.c.l.b16 %v1002
        %v1515 = vunpack.c.l.b16 %v1003
        %v1516 = vunpack.c.l.b16 %v1004
        %v1517 = vunpack.c.l.b16 %v1005
        %v1518 = vunpack.c.l.b16 %v1006
        %v1519 = vunpack.c.l.b16 %v1007
        %v1520 = vunpack.c.l.b16 %v1008
        %v1521 = vunpack.c.l.b16 %v1009
        %v1522 = vunpack.c.l.b16 %v1010
        %v1523 = vunpack.c.l.b16 %v1011
        %v1524 = vunpack.c.l.b16 %v1012
        %v1525 = vunpack.c.l.b16 %v1013
        %v1526 = vunpack.c.l.b16 %v1014
        %v1527 = vunpack.c.l.b16 %v1015
        %v1528 = vunpack.c.l.b16 %v1016
        %v1529 = vunpack.c.l.b16 %v1017
        %v1530 = vunpack.c.l.b16 %v1018
        %v1531 = vunpack.c.l.b16 %v1019
        %v1532 = vunpack.c.l.b16 %v1020
        %v1533 = vunpack.c.l.b16 %v1021
        %v1534 = vunpack.c.l.b16 %v1022
        %v1535 = vunpack.c.l.b16 %v1023
        %v1536 = vunpack.c.l.b16 %v1024
        %v1537 = vunpack.c.l.b16 %v1025
        %v1538 = vunpack.c.l.b16 %v1026
        %v1539 = vunpack.c.l.b16 %v1027
        %v1540 = vunpack.c.l.b16 %v1028
        %v1541 = vunpack.c.l.b16 %v1029
        %v1542 = vunpack.c.l.b16 %v1030
        %v1543 = vunpack.c.l.b16 %v1031
        %v1544 = vunpack.c.l.b16 %v1032
        %v1545 = vpack.c.b16 %v1482, %v1481
        %v1546 = vpack.c.b16 %v1484, %v1483
        %v1547 = vpack.c.b16 %v1486, %v1485
        %v1548 = vpack.c.b16 %v1488, %v1487
        %v1549 = vpack.c.b16 %v1490, %v1489
        %v1550 = vpack.c.b16 %v1492, %v1491
        %v1551 = vpack.c.b16 %v1494, %v1493
        %v1552 = vpack.c.b16 %v1496, %v1495
        %v1553 = vpack.c.b16 %v1498, %v1497
        %v1554 = vpack.c.b16 %v1500, %v1499
        %v1555 = vpack.c.b16 %v1502, %v1501
        %v1556 = vpack.c.b16 %v1504, %v1503
        %v1557 = vpack.c.b16 %v1506, %v1505
        %v1558 = vpack.c.b16 %v1508, %v1507
        %v1559 = vpack.c.b16 %v1510, %v1509
        %v1560 = vpack.c.b16 %v1512, %v1511
        %v1561 = vpack.c.b16 %v1514, %v1513
        %v1562 = vpack.c.b16 %v1516, %v1515
        %v1563 = vpack.c.b16 %v1518, %v1517
        %v1564 = vpack.c.b16 %v1520, %v1519
        %v1565 = vpack.c.b16 %v1522, %v1521
        %v1566 = vpack.c.b16 %v1524, %v1523
        %v1567 = vpack.c.b16 %v1526, %v1525
        %v1568 = vpack.c.b16 %v1528, %v1527
        %v1569 = vpack.c.b16 %v1530, %v1529
        %v1570 = vpack.c.b16 %v1532, %v1531
        %v1571 = vpack.c.b16 %v1534, %v1533
        %v1572 = vpack.c.b16 %v1536, %v1535
        %v1573 = vpack.c.b16 %v1538, %v1537
        %v1574 = vpack.c.b16 %v1540, %v1539
        %v1575 = vpack.c.b16 %v1542, %v1541
        %v1576 = vpack.c.b16 %v1544, %v1543
        %1609 = vmatprep.subr.bf16.mxu0 %v954
        %1610 = vmatpush1.bf16.msra.mxu0 %v953
        %1611 = vmatprep.subr.bf16.mxu0 %v956
        %1612 = vmatpush1.bf16.msra.mxu0 %v955
        %1613 = vmatprep.subr.bf16.mxu0 %v958
        %1614 = vmatpush1.bf16.msra.mxu0 %v957
        %1615 = vmatprep.subr.bf16.mxu0 %v960
        %1616 = vmatpush1.bf16.msra.mxu0 %v959
        %1617 = vmatprep.subr.bf16.mxu0 %v962
        %1618 = vmatpush1.bf16.msra.mxu0 %v961
        %1619 = vmatprep.subr.bf16.mxu0 %v964
        %1620 = vmatpush1.bf16.msra.mxu0 %v963
        %1621 = vmatprep.subr.bf16.mxu0 %v966
        %1622 = vmatpush1.bf16.msra.mxu0 %v965
        %1623 = vmatprep.subr.bf16.mxu0 %v968
        %1624 = vmatpush1.bf16.msra.mxu0 %v967
        %1625 = vmatprep.subr.bf16.mxu0 0
        %1626 = vmatpush1.bf16.msra.mxu0 0
        %1627 = vmatprep.subr.bf16.mxu0 0
        %1628 = vmatpush1.bf16.msra.mxu0 0
        %1629 = vmatprep.subr.bf16.mxu0 0
        %1630 = vmatpush1.bf16.msra.mxu0 0
        %1631 = vmatprep.subr.bf16.mxu0 0
        %1632 = vmatpush1.bf16.msra.mxu0 0
        %1633 = vmatprep.subr.bf16.mxu0 0
        %1634 = vmatpush1.bf16.msra.mxu0 0
        %1635 = vmatprep.subr.bf16.mxu0 0
        %1636 = vmatpush1.bf16.msra.mxu0 0
        %1637 = vmatprep.subr.bf16.mxu0 0
        %1638 = vmatpush1.bf16.msra.mxu0 0
        %1639 = vmatprep.subr.bf16.mxu0 0
        %1640 = vmatpush1.bf16.msra.mxu0 0
        %1641 = vmatprep.mubr.bf16.mxu0 0
        %1642 = vmatmul.mubr.bf16.gmra.mrb[0].mxu0 %v1545
        %v1643 = vpop.f32.mrb[0].mxu0
        %v1644 = vadd.f32 %v1100, %v1643
        %v1645 = vpop.f32.mrb[0].mxu0
        %v1646 = vadd.f32 %v1100, %v1645
        %v1647 = vpop.f32.mrb[0].mxu0
        %v1648 = vadd.f32 %v1105, %v1647
        %v1649 = vpop.f32.mrb[0].mxu0
        %v1650 = vadd.f32 %v1105, %v1649
        %1651 = vmatprep.mubr.bf16.mxu0 0
        %1652 = vmatmul.mubr.bf16.gmra.mrb[0].mxu0 %v1546
        %v1653 = vpop.f32.mrb[0].mxu0
        %v1654 = vadd.f32 %v1110, %v1653
        %v1655 = vpop.f32.mrb[0].mxu0
        %v1656 = vadd.f32 %v1110, %v1655
        %v1657 = vpop.f32.mrb[0].mxu0
        %v1658 = vadd.f32 %v1115, %v1657
        %v1659 = vpop.f32.mrb[0].mxu0
        %v1660 = vadd.f32 %v1115, %v1659
        %1661 = vmatprep.mubr.bf16.mxu0 0
        %1662 = vmatmul.mubr.bf16.gmra.mrb[0].mxu0 %v1547
        %v1663 = vpop.f32.mrb[0].mxu0
        %v1664 = vadd.f32 %v1120, %v1663
        %v1665 = vpop.f32.mrb[0].mxu0
        %v1666 = vadd.f32 %v1120, %v1665
        %v1667 = vpop.f32.mrb[0].mxu0
        %v1668 = vadd.f32 %v1125, %v1667
        %v1669 = vpop.f32.mrb[0].mxu0
        %v1670 = vadd.f32 %v1125, %v1669
        %1671 = vmatprep.mubr.bf16.mxu0 0
        %1672 = vmatmul.mubr.bf16.gmra.mrb[0].mxu0 %v1548
        %v1673 = vpop.f32.mrb[0].mxu0
        %v1674 = vadd.f32 %v1130, %v1673
        %v1675 = vpop.f32.mrb[0].mxu0
        %v1676 = vadd.f32 %v1130, %v1675
        %v1677 = vpop.f32.mrb[0].mxu0
        %v1678 = vadd.f32 %v1135, %v1677
        %v1679 = vpop.f32.mrb[0].mxu0
        %v1680 = vadd.f32 %v1135, %v1679
        %1681 = vmatprep.mubr.bf16.mxu0 0
        %1682 = vmatmul.mubr.bf16.gmra.mrb[0].mxu0 %v1549
        %v1683 = vpop.f32.mrb[0].mxu0
        %v1684 = vadd.f32 %v1140, %v1683
        %v1685 = vpop.f32.mrb[0].mxu0
        %v1686 = vadd.f32 %v1140, %v1685
        %v1687 = vpop.f32.mrb[0].mxu0
        %v1688 = vadd.f32 %v1145, %v1687
        %v1689 = vpop.f32.mrb[0].mxu0
        %v1690 = vadd.f32 %v1145, %v1689
        %1691 = vmatprep.mubr.bf16.mxu0 0
        %1692 = vmatmul.mubr.bf16.gmra.mrb[0].mxu0 %v1550
        %v1693 = vpop.f32.mrb[0].mxu0
        %v1694 = vadd.f32 %v1150, %v1693
        %v1695 = vpop.f32.mrb[0].mxu0
        %v1696 = vadd.f32 %v1150, %v1695
        %v1697 = vpop.f32.mrb[0].mxu0
        %v1698 = vadd.f32 %v1155, %v1697
        %v1699 = vpop.f32.mrb[0].mxu0
        %v1700 = vadd.f32 %v1155, %v1699
        %1701 = vmatprep.mubr.bf16.mxu0 0
        %1702 = vmatmul.mubr.bf16.gmra.mrb[0].mxu0 %v1551
        %v1703 = vpop.f32.mrb[0].mxu0
        %v1704 = vadd.f32 %v1160, %v1703
        %v1705 = vpop.f32.mrb[0].mxu0
        %v1706 = vadd.f32 %v1160, %v1705
        %v1707 = vpop.f32.mrb[0].mxu0
        %v1708 = vadd.f32 %v1165, %v1707
        %v1709 = vpop.f32.mrb[0].mxu0
        %v1710 = vadd.f32 %v1165, %v1709
        %1711 = vmatprep.mubr.bf16.mxu0 0
        %1712 = vmatmul.mubr.bf16.gmra.mrb[0].mxu0 %v1552
        %v1713 = vpop.f32.mrb[0].mxu0
        %v1714 = vadd.f32 %v1170, %v1713
        %v1715 = vpop.f32.mrb[0].mxu0
        %v1716 = vadd.f32 %v1170, %v1715
        %v1717 = vpop.f32.mrb[0].mxu0
        %v1718 = vadd.f32 %v1175, %v1717
        %v1719 = vpop.f32.mrb[0].mxu0
        %v1720 = vadd.f32 %v1175, %v1719
        %1721 = vmatprep.mubr.bf16.mxu0 0
        %1722 = vmatmul.mubr.bf16.gmra.mrb[0].mxu0 %v1553
        %v1723 = vpop.f32.mrb[0].mxu0
        %v1724 = vadd.f32 %v1180, %v1723
        %v1725 = vpop.f32.mrb[0].mxu0
        %v1726 = vadd.f32 %v1180, %v1725
        %v1727 = vpop.f32.mrb[0].mxu0
        %v1728 = vadd.f32 %v1185, %v1727
        %v1729 = vpop.f32.mrb[0].mxu0
        %v1730 = vadd.f32 %v1185, %v1729
        %1731 = vmatprep.mubr.bf16.mxu0 0
        %1732 = vmatmul.mubr.bf16.gmra.mrb[0].mxu0 %v1554
        %v1733 = vpop.f32.mrb[0].mxu0
        %v1734 = vadd.f32 %v1190, %v1733
        %v1735 = vpop.f32.mrb[0].mxu0
        %v1736 = vadd.f32 %v1190, %v1735
        %v1737 = vpop.f32.mrb[0].mxu0
        %v1738 = vadd.f32 %v1195, %v1737
        %v1739 = vpop.f32.mrb[0].mxu0
        %v1740 = vadd.f32 %v1195, %v1739
        %1741 = vmatprep.mubr.bf16.mxu0 0
        %1742 = vmatmul.mubr.bf16.gmra.mrb[0].mxu0 %v1555
        %v1743 = vpop.f32.mrb[0].mxu0
        %v1744 = vadd.f32 %v1200, %v1743
        %v1745 = vpop.f32.mrb[0].mxu0
        %v1746 = vadd.f32 %v1200, %v1745
        %v1747 = vpop.f32.mrb[0].mxu0
        %v1748 = vadd.f32 %v1205, %v1747
        %v1749 = vpop.f32.mrb[0].mxu0
        %v1750 = vadd.f32 %v1205, %v1749
        %1751 = vmatprep.mubr.bf16.mxu0 0
        %1752 = vmatmul.mubr.bf16.gmra.mrb[0].mxu0 %v1556
        %v1753 = vpop.f32.mrb[0].mxu0
        %v1754 = vadd.f32 %v1210, %v1753
        %v1755 = vpop.f32.mrb[0].mxu0
        %v1756 = vadd.f32 %v1210, %v1755
        %v1757 = vpop.f32.mrb[0].mxu0
        %v1758 = vadd.f32 %v1215, %v1757
        %v1759 = vpop.f32.mrb[0].mxu0
        %v1760 = vadd.f32 %v1215, %v1759
        %1761 = vmatprep.mubr.bf16.mxu0 0
        %1762 = vmatmul.mubr.bf16.gmra.mrb[0].mxu0 %v1557
        %v1763 = vpop.f32.mrb[0].mxu0
        %v1764 = vadd.f32 %v1220, %v1763
        %v1765 = vpop.f32.mrb[0].mxu0
        %v1766 = vadd.f32 %v1220, %v1765
        %v1767 = vpop.f32.mrb[0].mxu0
        %v1768 = vadd.f32 %v1225, %v1767
        %v1769 = vpop.f32.mrb[0].mxu0
        %v1770 = vadd.f32 %v1225, %v1769
        %1771 = vmatprep.mubr.bf16.mxu0 0
        %1772 = vmatmul.mubr.bf16.gmra.mrb[0].mxu0 %v1558
        %v1773 = vpop.f32.mrb[0].mxu0
        %v1774 = vadd.f32 %v1230, %v1773
        %v1775 = vpop.f32.mrb[0].mxu0
        %v1776 = vadd.f32 %v1230, %v1775
        %v1777 = vpop.f32.mrb[0].mxu0
        %v1778 = vadd.f32 %v1235, %v1777
        %v1779 = vpop.f32.mrb[0].mxu0
        %v1780 = vadd.f32 %v1235, %v1779
        %1781 = vmatprep.mubr.bf16.mxu0 0
        %1782 = vmatmul.mubr.bf16.gmra.mrb[0].mxu0 %v1559
        %v1783 = vpop.f32.mrb[0].mxu0
        %v1784 = vadd.f32 %v1240, %v1783
        %v1785 = vpop.f32.mrb[0].mxu0
        %v1786 = vadd.f32 %v1240, %v1785
        %v1787 = vpop.f32.mrb[0].mxu0
        %v1788 = vadd.f32 %v1245, %v1787
        %v1789 = vpop.f32.mrb[0].mxu0
        %v1790 = vadd.f32 %v1245, %v1789
        %1791 = vmatprep.mubr.bf16.mxu0 0
        %1792 = vmatmul.mubr.bf16.gmra.mrb[0].mxu0 %v1560
        %v1793 = vpop.f32.mrb[0].mxu0
        %v1794 = vadd.f32 %v1250, %v1793
        %v1795 = vpop.f32.mrb[0].mxu0
        %v1796 = vadd.f32 %v1250, %v1795
        %v1797 = vpop.f32.mrb[0].mxu0
        %v1798 = vadd.f32 %v1255, %v1797
        %v1799 = vpop.f32.mrb[0].mxu0
        %v1800 = vadd.f32 %v1255, %v1799
        %1801 = vmatprep.mubr.bf16.mxu0 0
        %1802 = vmatmul.mubr.bf16.gmra.mrb[0].mxu0 %v1561
        %v1803 = vpop.f32.mrb[0].mxu0
        %v1804 = vadd.f32 %v1260, %v1803
        %v1805 = vpop.f32.mrb[0].mxu0
        %v1806 = vadd.f32 %v1260, %v1805
        %v1807 = vpop.f32.mrb[0].mxu0
        %v1808 = vadd.f32 %v1265, %v1807
        %v1809 = vpop.f32.mrb[0].mxu0
        %v1810 = vadd.f32 %v1265, %v1809
        %1811 = vmatprep.mubr.bf16.mxu0 0
        %1812 = vmatmul.mubr.bf16.gmra.mrb[0].mxu0 %v1562
        %v1813 = vpop.f32.mrb[0].mxu0
        %v1814 = vadd.f32 %v1270, %v1813
        %v1815 = vpop.f32.mrb[0].mxu0
        %v1816 = vadd.f32 %v1270, %v1815
        %v1817 = vpop.f32.mrb[0].mxu0
        %v1818 = vadd.f32 %v1275, %v1817
        %v1819 = vpop.f32.mrb[0].mxu0
        %v1820 = vadd.f32 %v1275, %v1819
        %1821 = vmatprep.mubr.bf16.mxu0 0
        %1822 = vmatmul.mubr.bf16.gmra.mrb[0].mxu0 %v1563
        %v1823 = vpop.f32.mrb[0].mxu0
        %v1824 = vadd.f32 %v1280, %v1823
        %v1825 = vpop.f32.mrb[0].mxu0
        %v1826 = vadd.f32 %v1280, %v1825
        %v1827 = vpop.f32.mrb[0].mxu0
        %v1828 = vadd.f32 %v1285, %v1827
        %v1829 = vpop.f32.mrb[0].mxu0
        %v1830 = vadd.f32 %v1285, %v1829
        %1831 = vmatprep.mubr.bf16.mxu0 0
        %1832 = vmatmul.mubr.bf16.gmra.mrb[0].mxu0 %v1564
        %v1833 = vpop.f32.mrb[0].mxu0
        %v1834 = vadd.f32 %v1290, %v1833
        %v1835 = vpop.f32.mrb[0].mxu0
        %v1836 = vadd.f32 %v1290, %v1835
        %v1837 = vpop.f32.mrb[0].mxu0
        %v1838 = vadd.f32 %v1295, %v1837
        %v1839 = vpop.f32.mrb[0].mxu0
        %v1840 = vadd.f32 %v1295, %v1839
        %1841 = vmatprep.mubr.bf16.mxu0 0
        %1842 = vmatmul.mubr.bf16.gmra.mrb[0].mxu0 %v1565
        %v1843 = vpop.f32.mrb[0].mxu0
        %v1844 = vadd.f32 %v1300, %v1843
        %v1845 = vpop.f32.mrb[0].mxu0
        %v1846 = vadd.f32 %v1300, %v1845
        %v1847 = vpop.f32.mrb[0].mxu0
        %v1848 = vadd.f32 %v1305, %v1847
        %v1849 = vpop.f32.mrb[0].mxu0
        %v1850 = vadd.f32 %v1305, %v1849
        %1851 = vmatprep.mubr.bf16.mxu0 0
        %1852 = vmatmul.mubr.bf16.gmra.mrb[0].mxu0 %v1566
        %v1853 = vpop.f32.mrb[0].mxu0
        %v1854 = vadd.f32 %v1310, %v1853
        %v1855 = vpop.f32.mrb[0].mxu0
        %v1856 = vadd.f32 %v1310, %v1855
        %v1857 = vpop.f32.mrb[0].mxu0
        %v1858 = vadd.f32 %v1315, %v1857
        %v1859 = vpop.f32.mrb[0].mxu0
        %v1860 = vadd.f32 %v1315, %v1859
        %1861 = vmatprep.mubr.bf16.mxu0 0
        %1862 = vmatmul.mubr.bf16.gmra.mrb[0].mxu0 %v1567
        %v1863 = vpop.f32.mrb[0].mxu0
        %v1864 = vadd.f32 %v1320, %v1863
        %v1865 = vpop.f32.mrb[0].mxu0
        %v1866 = vadd.f32 %v1320, %v1865
        %v1867 = vpop.f32.mrb[0].mxu0
        %v1868 = vadd.f32 %v1325, %v1867
        %v1869 = vpop.f32.mrb[0].mxu0
        %v1870 = vadd.f32 %v1325, %v1869
        %1871 = vmatprep.mubr.bf16.mxu0 0
        %1872 = vmatmul.mubr.bf16.gmra.mrb[0].mxu0 %v1568
        %v1873 = vpop.f32.mrb[0].mxu0
        %v1874 = vadd.f32 %v1330, %v1873
        %v1875 = vpop.f32.mrb[0].mxu0
        %v1876 = vadd.f32 %v1330, %v1875
        %v1877 = vpop.f32.mrb[0].mxu0
        %v1878 = vadd.f32 %v1335, %v1877
        %v1879 = vpop.f32.mrb[0].mxu0
        %v1880 = vadd.f32 %v1335, %v1879
        %1881 = vmatprep.mubr.bf16.mxu0 0
        %1882 = vmatmul.mubr.bf16.gmra.mrb[0].mxu0 %v1569
        %v1883 = vpop.f32.mrb[0].mxu0
        %v1884 = vadd.f32 %v1340, %v1883
        %v1885 = vpop.f32.mrb[0].mxu0
        %v1886 = vadd.f32 %v1340, %v1885
        %v1887 = vpop.f32.mrb[0].mxu0
        %v1888 = vadd.f32 %v1345, %v1887
        %v1889 = vpop.f32.mrb[0].mxu0
        %v1890 = vadd.f32 %v1345, %v1889
        %1891 = vmatprep.mubr.bf16.mxu0 0
        %1892 = vmatmul.mubr.bf16.gmra.mrb[0].mxu0 %v1570
        %v1893 = vpop.f32.mrb[0].mxu0
        %v1894 = vadd.f32 %v1350, %v1893
        %v1895 = vpop.f32.mrb[0].mxu0
        %v1896 = vadd.f32 %v1350, %v1895
        %v1897 = vpop.f32.mrb[0].mxu0
        %v1898 = vadd.f32 %v1355, %v1897
        %v1899 = vpop.f32.mrb[0].mxu0
        %v1900 = vadd.f32 %v1355, %v1899
        %1901 = vmatprep.mubr.bf16.mxu0 0
        %1902 = vmatmul.mubr.bf16.gmra.mrb[0].mxu0 %v1571
        %v1903 = vpop.f32.mrb[0].mxu0
        %v1904 = vadd.f32 %v1360, %v1903
        %v1905 = vpop.f32.mrb[0].mxu0
        %v1906 = vadd.f32 %v1360, %v1905
        %v1907 = vpop.f32.mrb[0].mxu0
        %v1908 = vadd.f32 %v1365, %v1907
        %v1909 = vpop.f32.mrb[0].mxu0
        %v1910 = vadd.f32 %v1365, %v1909
        %1911 = vmatprep.mubr.bf16.mxu0 0
        %1912 = vmatmul.mubr.bf16.gmra.mrb[0].mxu0 %v1572
        %v1913 = vpop.f32.mrb[0].mxu0
        %v1914 = vadd.f32 %v1370, %v1913
        %v1915 = vpop.f32.mrb[0].mxu0
        %v1916 = vadd.f32 %v1370, %v1915
        %v1917 = vpop.f32.mrb[0].mxu0
        %v1918 = vadd.f32 %v1375, %v1917
        %v1919 = vpop.f32.mrb[0].mxu0
        %v1920 = vadd.f32 %v1375, %v1919
        %1921 = vmatprep.mubr.bf16.mxu0 0
        %1922 = vmatmul.mubr.bf16.gmra.mrb[0].mxu0 %v1573
        %v1923 = vpop.f32.mrb[0].mxu0
        %v1924 = vadd.f32 %v1380, %v1923
        %v1925 = vpop.f32.mrb[0].mxu0
        %v1926 = vadd.f32 %v1380, %v1925
        %v1927 = vpop.f32.mrb[0].mxu0
        %v1928 = vadd.f32 %v1385, %v1927
        %v1929 = vpop.f32.mrb[0].mxu0
        %v1930 = vadd.f32 %v1385, %v1929
        %1931 = vmatprep.mubr.bf16.mxu0 0
        %1932 = vmatmul.mubr.bf16.gmra.mrb[0].mxu0 %v1574
        %v1933 = vpop.f32.mrb[0].mxu0
        %v1934 = vadd.f32 %v1390, %v1933
        %v1935 = vpop.f32.mrb[0].mxu0
        %v1936 = vadd.f32 %v1390, %v1935
        %v1937 = vpop.f32.mrb[0].mxu0
        %v1938 = vadd.f32 %v1395, %v1937
        %v1939 = vpop.f32.mrb[0].mxu0
        %v1940 = vadd.f32 %v1395, %v1939
        %1941 = vmatprep.mubr.bf16.mxu0 0
        %1942 = vmatmul.mubr.bf16.gmra.mrb[0].mxu0 %v1575
        %v1943 = vpop.f32.mrb[0].mxu0
        %v1944 = vadd.f32 %v1400, %v1943
        %v1945 = vpop.f32.mrb[0].mxu0
        %v1946 = vadd.f32 %v1400, %v1945
        %v1947 = vpop.f32.mrb[0].mxu0
        %v1948 = vadd.f32 %v1405, %v1947
        %v1949 = vpop.f32.mrb[0].mxu0
        %v1950 = vadd.f32 %v1405, %v1949
        %1951 = vmatprep.mubr.bf16.mxu0 0
        %1952 = vmatmul.mubr.bf16.gmra.mrb[0].mxu0 %v1576
        %v1953 = vpop.f32.mrb[0].mxu0
        %v1954 = vadd.f32 %v1410, %v1953
        %v1955 = vpop.f32.mrb[0].mxu0
        %v1956 = vadd.f32 %v1410, %v1955
        %v1957 = vpop.f32.mrb[0].mxu0
        %v1958 = vadd.f32 %v1415, %v1957
        %v1959 = vpop.f32.mrb[0].mxu0
        %v1960 = vadd.f32 %v1415, %v1959
        %1961 = vdwg.mxu0
        %v1962 = vld [vmem:[%s276] sm:$0xff]
        %v1963 = vld [vmem:[%s276 + $0x8] sm:$0xff]
        %v1964 = vld [vmem:[%s276 + $0x10] sm:$0xff]
        %v1965 = vld [vmem:[%s276 + $0x18] sm:$0xff]
        %v1966 = vld [vmem:[%s276 + $0x20] sm:$0xff]
        %v1967 = vld [vmem:[%s276 + $0x28] sm:$0xff]
        %v1968 = vld [vmem:[%s276 + $0x30] sm:$0xff]
        %v1969 = vld [vmem:[%s276 + $0x38] sm:$0xff]
        %v1970 = vld [vmem:[%s276 + $0x40] sm:$0xff]
        %v1971 = vld [vmem:[%s276 + $0x48] sm:$0xff]
        %v1972 = vld [vmem:[%s276 + $0x50] sm:$0xff]
        %v1973 = vld [vmem:[%s276 + $0x58] sm:$0xff]
        %v1974 = vld [vmem:[%s276 + $0x60] sm:$0xff]
        %v1975 = vld [vmem:[%s276 + $0x68] sm:$0xff]
        %v1976 = vld [vmem:[%s276 + $0x70] sm:$0xff]
        %v1977 = vld [vmem:[%s276 + $0x78] sm:$0xff]
        %v1978 = vld [vmem:[%s276 + $0x80] sm:$0xff]
        %v1979 = vld [vmem:[%s276 + $0x88] sm:$0xff]
        %v1980 = vld [vmem:[%s276 + $0x90] sm:$0xff]
        %v1981 = vld [vmem:[%s276 + $0x98] sm:$0xff]
        %v1982 = vld [vmem:[%s276 + $0xa0] sm:$0xff]
        %v1983 = vld [vmem:[%s276 + $0xa8] sm:$0xff]
        %v1984 = vld [vmem:[%s276 + $0xb0] sm:$0xff]
        %v1985 = vld [vmem:[%s276 + $0xb8] sm:$0xff]
        %v1986 = vld [vmem:[%s276 + $0xc0] sm:$0xff]
        %v1987 = vld [vmem:[%s276 + $0xc8] sm:$0xff]
        %v1988 = vld [vmem:[%s276 + $0xd0] sm:$0xff]
        %v1989 = vld [vmem:[%s276 + $0xd8] sm:$0xff]
        %v1990 = vld [vmem:[%s276 + $0xe0] sm:$0xff]
        %v1991 = vld [vmem:[%s276 + $0xe8] sm:$0xff]
        %v1992 = vld [vmem:[%s276 + $0xf0] sm:$0xff]
        %v1993 = vld [vmem:[%s276 + $0xf8] sm:$0xff]
        %v1994 = vld [vmem:[%s276 + $0x100] sm:$0xff]
        %v1995 = vld [vmem:[%s276 + $0x108] sm:$0xff]
        %v1996 = vld [vmem:[%s276 + $0x110] sm:$0xff]
        %v1997 = vld [vmem:[%s276 + $0x118] sm:$0xff]
        %v1998 = vld [vmem:[%s276 + $0x120] sm:$0xff]
        %v1999 = vld [vmem:[%s276 + $0x128] sm:$0xff]
        %v2000 = vld [vmem:[%s276 + $0x130] sm:$0xff]
        %v2001 = vld [vmem:[%s276 + $0x138] sm:$0xff]
        %v2002 = vld [vmem:[%s276 + $0x140] sm:$0xff]
        %v2003 = vld [vmem:[%s276 + $0x148] sm:$0xff]
        %v2004 = vld [vmem:[%s276 + $0x150] sm:$0xff]
        %v2005 = vld [vmem:[%s276 + $0x158] sm:$0xff]
        %v2006 = vld [vmem:[%s276 + $0x160] sm:$0xff]
        %v2007 = vld [vmem:[%s276 + $0x168] sm:$0xff]
        %v2008 = vld [vmem:[%s276 + $0x170] sm:$0xff]
        %v2009 = vld [vmem:[%s276 + $0x178] sm:$0xff]
        %v2010 = vld [vmem:[%s276 + $0x180] sm:$0xff]
        %v2011 = vld [vmem:[%s276 + $0x188] sm:$0xff]
        %v2012 = vld [vmem:[%s276 + $0x190] sm:$0xff]
        %v2013 = vld [vmem:[%s276 + $0x198] sm:$0xff]
        %v2014 = vld [vmem:[%s276 + $0x1a0] sm:$0xff]
        %v2015 = vld [vmem:[%s276 + $0x1a8] sm:$0xff]
        %v2016 = vld [vmem:[%s276 + $0x1b0] sm:$0xff]
        %v2017 = vld [vmem:[%s276 + $0x1b8] sm:$0xff]
        %v2018 = vld [vmem:[%s276 + $0x1c0] sm:$0xff]
        %v2019 = vld [vmem:[%s276 + $0x1c8] sm:$0xff]
        %v2020 = vld [vmem:[%s276 + $0x1d0] sm:$0xff]
        %v2021 = vld [vmem:[%s276 + $0x1d8] sm:$0xff]
        %v2022 = vld [vmem:[%s276 + $0x1e0] sm:$0xff]
        %v2023 = vld [vmem:[%s276 + $0x1e8] sm:$0xff]
        %v2024 = vld [vmem:[%s276 + $0x1f0] sm:$0xff]
        %v2025 = vld [vmem:[%s276 + $0x1f8] sm:$0xff]
        %v2026 = vmul.f32 %v1644, %v1962
        %v2027 = vmul.f32 %v1646, %v1963
        %v2028 = vmul.f32 %v1648, %v1964
        %v2029 = vmul.f32 %v1650, %v1965
        %v2030 = vmul.f32 %v1654, %v1966
        %v2031 = vmul.f32 %v1656, %v1967
        %v2032 = vmul.f32 %v1658, %v1968
        %v2033 = vmul.f32 %v1660, %v1969
        %v2034 = vmul.f32 %v1664, %v1970
        %v2035 = vmul.f32 %v1666, %v1971
        %v2036 = vmul.f32 %v1668, %v1972
        %v2037 = vmul.f32 %v1670, %v1973
        %v2038 = vmul.f32 %v1674, %v1974
        %v2039 = vmul.f32 %v1676, %v1975
        %v2040 = vmul.f32 %v1678, %v1976
        %v2041 = vmul.f32 %v1680, %v1977
        %v2042 = vmul.f32 %v1684, %v1978
        %v2043 = vmul.f32 %v1686, %v1979
        %v2044 = vmul.f32 %v1688, %v1980
        %v2045 = vmul.f32 %v1690, %v1981
        %v2046 = vmul.f32 %v1694, %v1982
        %v2047 = vmul.f32 %v1696, %v1983
        %v2048 = vmul.f32 %v1698, %v1984
        %v2049 = vmul.f32 %v1700, %v1985
        %v2050 = vmul.f32 %v1704, %v1986
        %v2051 = vmul.f32 %v1706, %v1987
        %v2052 = vmul.f32 %v1708, %v1988
        %v2053 = vmul.f32 %v1710, %v1989
        %v2054 = vmul.f32 %v1714, %v1990
        %v2055 = vmul.f32 %v1716, %v1991
        %v2056 = vmul.f32 %v1718, %v1992
        %v2057 = vmul.f32 %v1720, %v1993
        %v2058 = vmul.f32 %v1724, %v1994
        %v2059 = vmul.f32 %v1726, %v1995
        %v2060 = vmul.f32 %v1728, %v1996
        %v2061 = vmul.f32 %v1730, %v1997
        %v2062 = vmul.f32 %v1734, %v1998
        %v2063 = vmul.f32 %v1736, %v1999
        %v2064 = vmul.f32 %v1738, %v2000
        %v2065 = vmul.f32 %v1740, %v2001
        %v2066 = vmul.f32 %v1744, %v2002
        %v2067 = vmul.f32 %v1746, %v2003
        %v2068 = vmul.f32 %v1748, %v2004
        %v2069 = vmul.f32 %v1750, %v2005
        %v2070 = vmul.f32 %v1754, %v2006
        %v2071 = vmul.f32 %v1756, %v2007
        %v2072 = vmul.f32 %v1758, %v2008
        %v2073 = vmul.f32 %v1760, %v2009
        %v2074 = vmul.f32 %v1764, %v2010
        %v2075 = vmul.f32 %v1766, %v2011
        %v2076 = vmul.f32 %v1768, %v2012
        %v2077 = vmul.f32 %v1770, %v2013
        %v2078 = vmul.f32 %v1774, %v2014
        %v2079 = vmul.f32 %v1776, %v2015
        %v2080 = vmul.f32 %v1778, %v2016
        %v2081 = vmul.f32 %v1780, %v2017
        %v2082 = vmul.f32 %v1784, %v2018
        %v2083 = vmul.f32 %v1786, %v2019
        %v2084 = vmul.f32 %v1788, %v2020
        %v2085 = vmul.f32 %v1790, %v2021
        %v2086 = vmul.f32 %v1794, %v2022
        %v2087 = vmul.f32 %v1796, %v2023
        %v2088 = vmul.f32 %v1798, %v2024
        %v2089 = vmul.f32 %v1800, %v2025
        %v2090 = vadd.f32 %v2026, %v1804
        %v2091 = vadd.f32 %v2027, %v1806
        %v2092 = vadd.f32 %v2028, %v1808
        %v2093 = vadd.f32 %v2029, %v1810
        %v2094 = vadd.f32 %v2030, %v1814
        %v2095 = vadd.f32 %v2031, %v1816
        %v2096 = vadd.f32 %v2032, %v1818
        %v2097 = vadd.f32 %v2033, %v1820
        %v2098 = vadd.f32 %v2034, %v1824
        %v2099 = vadd.f32 %v2035, %v1826
        %v2100 = vadd.f32 %v2036, %v1828
        %v2101 = vadd.f32 %v2037, %v1830
        %v2102 = vadd.f32 %v2038, %v1834
        %v2103 = vadd.f32 %v2039, %v1836
        %v2104 = vadd.f32 %v2040, %v1838
        %v2105 = vadd.f32 %v2041, %v1840
        %v2106 = vadd.f32 %v2042, %v1844
        %v2107 = vadd.f32 %v2043, %v1846
        %v2108 = vadd.f32 %v2044, %v1848
        %v2109 = vadd.f32 %v2045, %v1850
        %v2110 = vadd.f32 %v2046, %v1854
        %v2111 = vadd.f32 %v2047, %v1856
        %v2112 = vadd.f32 %v2048, %v1858
        %v2113 = vadd.f32 %v2049, %v1860
        %v2114 = vadd.f32 %v2050, %v1864
        %v2115 = vadd.f32 %v2051, %v1866
        %v2116 = vadd.f32 %v2052, %v1868
        %v2117 = vadd.f32 %v2053, %v1870
        %v2118 = vadd.f32 %v2054, %v1874
        %v2119 = vadd.f32 %v2055, %v1876
        %v2120 = vadd.f32 %v2056, %v1878
        %v2121 = vadd.f32 %v2057, %v1880
        %v2122 = vadd.f32 %v2058, %v1884
        %v2123 = vadd.f32 %v2059, %v1886
        %v2124 = vadd.f32 %v2060, %v1888
        %v2125 = vadd.f32 %v2061, %v1890
        %v2126 = vadd.f32 %v2062, %v1894
        %v2127 = vadd.f32 %v2063, %v1896
        %v2128 = vadd.f32 %v2064, %v1898
        %v2129 = vadd.f32 %v2065, %v1900
        %v2130 = vadd.f32 %v2066, %v1904
        %v2131 = vadd.f32 %v2067, %v1906
        %v2132 = vadd.f32 %v2068, %v1908
        %v2133 = vadd.f32 %v2069, %v1910
        %v2134 = vadd.f32 %v2070, %v1914
        %v2135 = vadd.f32 %v2071, %v1916
        %v2136 = vadd.f32 %v2072, %v1918
        %v2137 = vadd.f32 %v2073, %v1920
        %v2138 = vadd.f32 %v2074, %v1924
        %v2139 = vadd.f32 %v2075, %v1926
        %v2140 = vadd.f32 %v2076, %v1928
        %v2141 = vadd.f32 %v2077, %v1930
        %v2142 = vadd.f32 %v2078, %v1934
        %v2143 = vadd.f32 %v2079, %v1936
        %v2144 = vadd.f32 %v2080, %v1938
        %v2145 = vadd.f32 %v2081, %v1940
        %v2146 = vadd.f32 %v2082, %v1944
        %v2147 = vadd.f32 %v2083, %v1946
        %v2148 = vadd.f32 %v2084, %v1948
        %v2149 = vadd.f32 %v2085, %v1950
        %v2150 = vadd.f32 %v2086, %v1954
        %v2151 = vadd.f32 %v2087, %v1956
        %v2152 = vadd.f32 %v2088, %v1958
        %v2153 = vadd.f32 %v2089, %v1960
        %2154 = vst [vmem:[%s313] sm:$0xff] %v2090
        %2155 = vst [vmem:[%s313 + $0x8] sm:$0xff] %v2091
        %2156 = vst [vmem:[%s313 + $0x10] sm:$0xff] %v2092
        %2157 = vst [vmem:[%s313 + $0x18] sm:$0xff] %v2093
        %2158 = vst [vmem:[%s313 + $0x20] sm:$0xff] %v2094
        %2159 = vst [vmem:[%s313 + $0x28] sm:$0xff] %v2095
        %2160 = vst [vmem:[%s313 + $0x30] sm:$0xff] %v2096
        %2161 = vst [vmem:[%s313 + $0x38] sm:$0xff] %v2097
        %2162 = vst [vmem:[%s313 + $0x40] sm:$0xff] %v2098
        %2163 = vst [vmem:[%s313 + $0x48] sm:$0xff] %v2099
        %2164 = vst [vmem:[%s313 + $0x50] sm:$0xff] %v2100
        %2165 = vst [vmem:[%s313 + $0x58] sm:$0xff] %v2101
        %2166 = vst [vmem:[%s313 + $0x60] sm:$0xff] %v2102
        %2167 = vst [vmem:[%s313 + $0x68] sm:$0xff] %v2103
        %2168 = vst [vmem:[%s313 + $0x70] sm:$0xff] %v2104
        %2169 = vst [vmem:[%s313 + $0x78] sm:$0xff] %v2105
        %2170 = vst [vmem:[%s313 + $0x80] sm:$0xff] %v2106
        %2171 = vst [vmem:[%s313 + $0x88] sm:$0xff] %v2107
        %2172 = vst [vmem:[%s313 + $0x90] sm:$0xff] %v2108
        %2173 = vst [vmem:[%s313 + $0x98] sm:$0xff] %v2109
        %2174 = vst [vmem:[%s313 + $0xa0] sm:$0xff] %v2110
        %2175 = vst [vmem:[%s313 + $0xa8] sm:$0xff] %v2111
        %2176 = vst [vmem:[%s313 + $0xb0] sm:$0xff] %v2112
        %2177 = vst [vmem:[%s313 + $0xb8] sm:$0xff] %v2113
        %2178 = vst [vmem:[%s313 + $0xc0] sm:$0xff] %v2114
        %2179 = vst [vmem:[%s313 + $0xc8] sm:$0xff] %v2115
        %2180 = vst [vmem:[%s313 + $0xd0] sm:$0xff] %v2116
        %2181 = vst [vmem:[%s313 + $0xd8] sm:$0xff] %v2117
        %2182 = vst [vmem:[%s313 + $0xe0] sm:$0xff] %v2118
        %2183 = vst [vmem:[%s313 + $0xe8] sm:$0xff] %v2119
        %2184 = vst [vmem:[%s313 + $0xf0] sm:$0xff] %v2120
        %2185 = vst [vmem:[%s313 + $0xf8] sm:$0xff] %v2121
        %2186 = vst [vmem:[%s313 + $0x100] sm:$0xff] %v2122
        %2187 = vst [vmem:[%s313 + $0x108] sm:$0xff] %v2123
        %2188 = vst [vmem:[%s313 + $0x110] sm:$0xff] %v2124
        %2189 = vst [vmem:[%s313 + $0x118] sm:$0xff] %v2125
        %2190 = vst [vmem:[%s313 + $0x120] sm:$0xff] %v2126
        %2191 = vst [vmem:[%s313 + $0x128] sm:$0xff] %v2127
        %2192 = vst [vmem:[%s313 + $0x130] sm:$0xff] %v2128
        %2193 = vst [vmem:[%s313 + $0x138] sm:$0xff] %v2129
        %2194 = vst [vmem:[%s313 + $0x140] sm:$0xff] %v2130
        %2195 = vst [vmem:[%s313 + $0x148] sm:$0xff] %v2131
        %2196 = vst [vmem:[%s313 + $0x150] sm:$0xff] %v2132
        %2197 = vst [vmem:[%s313 + $0x158] sm:$0xff] %v2133
        %2198 = vst [vmem:[%s313 + $0x160] sm:$0xff] %v2134
        %2199 = vst [vmem:[%s313 + $0x168] sm:$0xff] %v2135
        %2200 = vst [vmem:[%s313 + $0x170] sm:$0xff] %v2136
        %2201 = vst [vmem:[%s313 + $0x178] sm:$0xff] %v2137
        %2202 = vst [vmem:[%s313 + $0x180] sm:$0xff] %v2138
        %2203 = vst [vmem:[%s313 + $0x188] sm:$0xff] %v2139
        %2204 = vst [vmem:[%s313 + $0x190] sm:$0xff] %v2140
        %2205 = vst [vmem:[%s313 + $0x198] sm:$0xff] %v2141
        %2206 = vst [vmem:[%s313 + $0x1a0] sm:$0xff] %v2142
        %2207 = vst [vmem:[%s313 + $0x1a8] sm:$0xff] %v2143
        %2208 = vst [vmem:[%s313 + $0x1b0] sm:$0xff] %v2144
        %2209 = vst [vmem:[%s313 + $0x1b8] sm:$0xff] %v2145
        %2210 = vst [vmem:[%s313 + $0x1c0] sm:$0xff] %v2146
        %2211 = vst [vmem:[%s313 + $0x1c8] sm:$0xff] %v2147
        %2212 = vst [vmem:[%s313 + $0x1d0] sm:$0xff] %v2148
        %2213 = vst [vmem:[%s313 + $0x1d8] sm:$0xff] %v2149
        %2214 = vst [vmem:[%s313 + $0x1e0] sm:$0xff] %v2150
        %2215 = vst [vmem:[%s313 + $0x1e8] sm:$0xff] %v2151
        %2216 = vst [vmem:[%s313 + $0x1f0] sm:$0xff] %v2152
        %2217 = vst [vmem:[%s313 + $0x1f8] sm:$0xff] %v2153
        %s2218 = sand.u32 %s185, 1
        %s2219 = scalar_lea.sflag [#allocation4], %s2218
        %s2220 = sand.u32 %s185, 1
        %s2221 = smul.addr %s2220, 512
        %s2222 = scalar_lea.vmem [#allocation5], %s2221
        // Predicated region
        $region49: #{tpu_custom_call.1} parent=43 // pred_check
          %p2223 = pneg %p195
        $region50: #{tpu_custom_call.1} parent=43 // pred_check_branch
          %2225 = sbr.rel (%p2223) target = $region52
        $region51: #{tpu_custom_call.1} parent=43 // pred_region
          %s2226 = smul.u32 2, %s28
          %s2228 = ssub.s32 8192, 8192
          %2229 = vsyncadd %s2219, %s2228
          %s2230 = smul.addr %s27, 64
          %s2231 = sadd.s32 %s2226, %s2230
          %s2232 = smul.addr %s2231, 128
          %s2233 = scalar_lea.hbm %s6, %s2232
          %s2234 = sshll.u32 %s2222, 4
          %s2235 = int_to_ptr.vmem [resolvable:$true] %s2234
          %2240 = dma.vmem_to_hbm [thread:$0]  %s2235, 8192, %s2233, %s2219, 256, 256, 16
        $region52: #{tpu_custom_call.1} parent=43 // pred_fallthru
          _
      $region44: #{tpu_custom_call.1} parent=5 // pred_fallthru
        _
      %p2241 = scmp.le.s32.totalorder 2, %s18
      // Predicated region
      $region53: #{tpu_custom_call.1} parent=5 // pred_check
        %p2242 = pneg %p2241
      $region54: #{tpu_custom_call.1} parent=5 // pred_check_branch
        %2244 = sbr.rel (%p2242) target = $region56
      $region55: #{tpu_custom_call.1} parent=5 // pred_region
        %s2245 = ssub.s32 %s18, 2
        // Predicated region
        $region57: #{tpu_custom_call.1} parent=55 // pred_check
          %p2246 = pneg %p201
        $region58: #{tpu_custom_call.1} parent=55 // pred_check_branch
          %2248 = sbr.rel (%p2246) target = $region60
        $region59: #{tpu_custom_call.1} parent=55 // pred_region
          %s2249 = sand.u32 %s186, 1
          %s2250 = scalar_lea.sflag [#allocation4], %s2249
          %s2251 = sand.u32 %s186, 1
          %s2252 = smul.addr %s2251, 512
          %s2253 = scalar_lea.vmem [#allocation5], %s2252
          %2254 = dma.done %s2250, 8192
        $region60: #{tpu_custom_call.1} parent=55 // pred_fallthru
          _
      $region56: #{tpu_custom_call.1} parent=5 // pred_fallthru
        _
    $region6: #{tpu_custom_call.1} parent=1 // loop_footer
      %s22 = sadd.s32 1, %s18
    $region7: #{tpu_custom_call.1} parent=1 // loop_footer_branch
      %17 = sbr.rel target = $region3
    $region8: #{tpu_custom_call.1} parent=1 // loop_exit
      _
    %2255 = vsyncpa [#allocation3], 1
    %s2256 = scalar_lea.sflag [#allocation3], 1
    %2257 = vsyncpa %s2256, 1
    %2258 = vsyncpa [#allocation4], 1
    %s2259 = scalar_lea.sflag [#allocation4], 1
    %2260 = vsyncpa %s2259, 1

</llo_original>
